<compile_context>
chip_gen: v6e
topology: v6e:2x2x1
jax: 0.10.0
libtpu: 0.0.40
codegen_flags: <defaults>
</compile_context>

<pallas_src>
import functools

import numpy as np
import jax
import jax.numpy as jnp
from jax.experimental import pallas as pl
from jax.experimental.pallas import tpu as pltpu

# ----- static sizes --------------------------------------------------------
NUM_FEATURES = 4        # PROTEINS node features (3 labels + degree)
FIN_PAD = 16            # pad the first GEMM's K (bf16 sublane tile = 16)
HID = 200               # GinNet hidden width ("nn = 200")
HID_PAD = 256           # lane-dense padding / native MXU depth
NCLASS = 2
BN_EPS = 1e-5

TM = 256                # node-row tile (review: >=256; grid is row tiles only)
NEG_BIG = -1e30
VMEM_LIMIT = 32 * 1024 * 1024   # safe on v5e/v6e/v7x; shapes here are tiny

_PARAMS_ROW = pltpu.CompilerParams(
    dimension_semantics=("parallel",), vmem_limit_bytes=VMEM_LIMIT)
_PARAMS_HEAD = pltpu.CompilerParams(
    dimension_semantics=("arbitrary",), vmem_limit_bytes=VMEM_LIMIT)


# ---------------------------------------------------------------------------
# Kernel 1: GIN layer 1.  h1 = BN1(relu(MLP((1+eps)*x + A@x)))   [folded BN]
# Grid: (row_tiles,), "parallel".  x is VMEM-resident; A row stripe streams.
# ---------------------------------------------------------------------------
def gin_layer_kernel(eps, x_ref, a_ref, w1_ref, b1_ref, w2_ref, b2_ref,
                     s_ref, t_ref, out_ref):
    row0 = pl.multiple_of(pl.program_id(0) * TM, TM)
    x_row = x_ref[pl.ds(row0, TM), :].astype(jnp.float32)        # (TM, FIN_PAD)

    # Aggregation: bf16 x bf16 MXU dot, f32 accumulate (A entries 0/1, exact).
    agg = (1.0 + eps) * x_row + jnp.dot(a_ref[...], x_ref[...],
                                        preferred_element_type=jnp.float32)

    # MLP (bf16 operands, f32 accumulate) + ReLU, then F.relu(conv) + folded BN.
    m = jnp.maximum(
        jnp.dot(agg.astype(jnp.bfloat16), w1_ref[...],
                preferred_element_type=jnp.float32) + b1_ref[...], 0.0)
    h = jnp.maximum(
        jnp.dot(m.astype(jnp.bfloat16), w2_ref[...],
                preferred_element_type=jnp.float32) + b2_ref[...], 0.0)
    out_ref[...] = (h * s_ref[...] + t_ref[...]).astype(out_ref.dtype)


def run_gin_layer(x_bf, a_bf, eps, w1, b1, w2, b2, scale, shift):
    n, fin = x_bf.shape
    hid = w1.shape[1]
    kernel = functools.partial(gin_layer_kernel, float(eps))
    # NOTE: weights are constant-index blocks; Pallas fetches them once.  With
    # these shapes the (double-)buffer overhead is negligible, so we skip
    # pipeline_mode=pl.Buffered(1).
    return pl.pallas_call(
        kernel,
        out_shape=jax.ShapeDtypeStruct((n, hid), jnp.bfloat16),   # h1 in bf16
        grid_spec=pltpu.PrefetchScalarGridSpec(
            num_scalar_prefetch=0,
            grid=(n // TM,),
            in_specs=[
                pl.BlockSpec((n, fin), lambda i: (0, 0)),      # x, VMEM-resident
                pl.BlockSpec((TM, n), lambda i: (i, 0)),       # A row stripe (bf16)
                pl.BlockSpec((fin, hid), lambda i: (0, 0)),    # W1 (bf16)
                pl.BlockSpec((1, hid), lambda i: (0, 0)),      # b1
                pl.BlockSpec((hid, hid), lambda i: (0, 0)),    # W2 (bf16)
                pl.BlockSpec((1, hid), lambda i: (0, 0)),      # b2
                pl.BlockSpec((1, hid), lambda i: (0, 0)),      # BN1 scale (folded)
                pl.BlockSpec((1, hid), lambda i: (0, 0)),      # BN1 shift (folded)
            ],
            out_specs=pl.BlockSpec((TM, hid), lambda i: (i, 0)),
        ),
        compiler_params=_PARAMS_ROW,
    )(x_bf, a_bf, w1, b1, w2, b2, scale, shift)


# ---------------------------------------------------------------------------
# Kernel 2: GIN layer 2 + per-row-tile partial add/max pools.
# Grid: (row_tiles,), "parallel" (megacore-friendly); partial pools are written
# per tile and reduced in the head kernel.  h1 is VMEM-resident (bf16).
# ---------------------------------------------------------------------------
def gin_layer_pool_kernel(eps, h_ref, a_ref, oh_ref, w1_ref, b1_ref,
                          w2_ref, b2_ref, s_ref, t_ref,
                          sum_out_ref, max_out_ref):
    row0 = pl.multiple_of(pl.program_id(0) * TM, TM)
    h_row = h_ref[pl.ds(row0, TM), :].astype(jnp.float32)        # (TM, HID_PAD)

    agg = (1.0 + eps) * h_row + jnp.dot(a_ref[...], h_ref[...],
                                        preferred_element_type=jnp.float32)
    m = jnp.maximum(
        jnp.dot(agg.astype(jnp.bfloat16), w1_ref[...],
                preferred_element_type=jnp.float32) + b1_ref[...], 0.0)
    y = jnp.maximum(
        jnp.dot(m.astype(jnp.bfloat16), w2_ref[...],
                preferred_element_type=jnp.float32) + b2_ref[...], 0.0)
    y = y * s_ref[...] + t_ref[...]                              # BN2 (eval, folded)

    oh = oh_ref[...]                                             # (B, TM) 0/1 f32
    # Partial global_add_pool: tiny f32 segment-sum matmul (padded nodes have
    # zero membership, so they never contribute).
    sum_out_ref[0] = jnp.dot(oh, y, preferred_element_type=jnp.float32)
    # Partial global_max_pool: per-graph masked max over this row tile.  No
    # (B, TM, HID) broadcast is materialized; the batch loop unrolls (B static).
    nb = oh.shape[0]
    max_out_ref[0] = jnp.concatenate(
        [jnp.max(jnp.where((oh[b, :] > 0.0)[:, None], y, NEG_BIG),
                 axis=0, keepdims=True)
         for b in range(nb)], axis=0)


def run_gin_layer_pool(h1_bf, a_bf, onehot, eps, w1, b1, w2, b2, scale, shift):
    n, hid = h1_bf.shape
    nb = onehot.shape[0]
    nt = n // TM
    kernel = functools.partial(gin_layer_pool_kernel, float(eps))
    return pl.pallas_call(
        kernel,
        out_shape=(jax.ShapeDtypeStruct((nt, nb, hid), jnp.float32),   # add partials
                   jax.ShapeDtypeStruct((nt, nb, hid), jnp.float32)),  # max partials
        grid_spec=pltpu.PrefetchScalarGridSpec(
            num_scalar_prefetch=0,
            grid=(nt,),
            in_specs=[
                pl.BlockSpec((n, hid), lambda i: (0, 0)),      # h1, VMEM-resident (bf16)
                pl.BlockSpec((TM, n), lambda i: (i, 0)),       # A row stripe (bf16)
                pl.BlockSpec((nb, TM), lambda i: (0, i)),      # graph membership tile
                pl.BlockSpec((hid, hid), lambda i: (0, 0)),    # W1 (bf16)
                pl.BlockSpec((1, hid), lambda i: (0, 0)),      # b1
                pl.BlockSpec((hid, hid), lambda i: (0, 0)),    # W2 (bf16)
                pl.BlockSpec((1, hid), lambda i: (0, 0)),      # b2
                pl.BlockSpec((1, hid), lambda i: (0, 0)),      # BN2 scale (folded)
                pl.BlockSpec((1, hid), lambda i: (0, 0)),      # BN2 shift (folded)
            ],
            out_specs=(pl.BlockSpec((1, nb, hid), lambda i: (i, 0, 0)),
                       pl.BlockSpec((1, nb, hid), lambda i: (i, 0, 0))),
        ),
        compiler_params=_PARAMS_ROW,
    )(h1_bf, a_bf, onehot, w1, b1, w2, b2, scale, shift)


# ---------------------------------------------------------------------------
# Kernel 3 (head): cross-tile pool reduce + fc2 + log_softmax.  Tiny.
# ---------------------------------------------------------------------------
def head_kernel(sum_ref, max_ref, wf_ref, bf_ref, out_ref):
    s = jnp.sum(sum_ref[...], axis=0)            # (B, HID_PAD) global add pool
    mx = jnp.max(max_ref[...], axis=0)           # (B, HID_PAD) global max pool
    hid = s.shape[1]
    wf = wf_ref[...]                             # (2*HID_PAD, 2), f32
    logits = (jnp.dot(s, wf[:hid, :], preferred_element_type=jnp.float32)
              + jnp.dot(mx, wf[hid:, :], preferred_element_type=jnp.float32)
              + bf_ref[...])                     # (B, 2)
    z = logits - jnp.max(logits, axis=1, keepdims=True)
    out_ref[...] = z - jnp.log(jnp.sum(jnp.exp(z), axis=1, keepdims=True))


def run_head(sum_part, max_part, wf, bf):
    nt, nb, hid = sum_part.shape
    return pl.pallas_call(
        head_kernel,
        out_shape=jax.ShapeDtypeStruct((nb, NCLASS), jnp.float32),
        grid_spec=pltpu.PrefetchScalarGridSpec(
            num_scalar_prefetch=0,
            grid=(1,),
            in_specs=[
                pl.BlockSpec((nt, nb, hid), lambda i: (0, 0, 0)),
                pl.BlockSpec((nt, nb, hid), lambda i: (0, 0, 0)),
                pl.BlockSpec((2 * hid, NCLASS), lambda i: (0, 0)),
                pl.BlockSpec((1, NCLASS), lambda i: (0, 0)),
            ],
            out_specs=pl.BlockSpec((nb, NCLASS), lambda i: (0, 0)),
        ),
        compiler_params=_PARAMS_HEAD,
    )(sum_part, max_part, wf, bf)


# ---------------------------------------------------------------------------
# Full forward (Pallas).  dropout(p=0.2) is the identity in eval mode.
# ---------------------------------------------------------------------------
def gin_net_forward(x, adj, onehot, p):
    n = x.shape[0]
    nb = onehot.shape[0]
    n_pad = ((n + TM - 1) // TM) * TM   # padded (isolated) nodes: zero adjacency
    #                                     and zero membership -> no effect on output
    # Build padded operands directly in their kernel dtypes (A is 0/1 -> exact bf16).
    x_p = (jnp.zeros((n_pad, FIN_PAD), jnp.bfloat16)
           .at[:n, :x.shape[1]].set(x.astype(jnp.bfloat16)))
    a_p = (jnp.zeros((n_pad, n_pad), jnp.bfloat16)
           .at[:n, :n].set(adj.astype(jnp.bfloat16)))
    oh_p = jnp.zeros((nb, n_pad), jnp.float32).at[:, :n].set(onehot)

    h1 = run_gin_layer(x_p, a_p, p["eps1"], p["w11"], p["b11"],
                       p["w12"], p["b12"], p["bn1_scale"], p["bn1_shift"])
    sum_part, max_part = run_gin_layer_pool(
        h1, a_p, oh_p, p["eps2"], p["w21"], p["b21"], p["w22"], p["b22"],
        p["bn2_scale"], p["bn2_shift"])
    return run_head(sum_part, max_part, p["wf"], p["bf"])


# ---------------------------------------------------------------------------
# Reference (unpadded).  mxu_bf16=True mirrors the kernel's precision policy
# (bf16-rounded MXU operands, f32 accumulate); mxu_bf16=False is pure f32.
# ---------------------------------------------------------------------------
def reference_forward(x, adj, batch_ids, raw, *, mxu_bf16=True):
    if mxu_bf16:
        r = lambda t: t.astype(jnp.bfloat16).astype(jnp.float32)
    else:
        r = lambda t: t
    dot = functools.partial(jnp.dot, precision=jax.lax.Precision.HIGHEST)

    def gin_layer(v, eps, w1, b1, w2, b2, bn):
        # v is already rounded per policy (it is an MXU operand).
        h = (1.0 + eps) * v + dot(r(adj), v)
        m = jax.nn.relu(dot(r(h), r(w1)) + b1)
        m = jax.nn.relu(dot(r(m), r(w2)) + b2)          # F.relu(conv(x))
        gamma, beta, mean, var = bn
        return (m - mean) / jnp.sqrt(var + BN_EPS) * gamma + beta

    v = gin_layer(r(x), raw["eps1"], raw["w11"], raw["b11"],
                  raw["w12"], raw["b12"], raw["bn1"])
    v = gin_layer(r(v), raw["eps2"], raw["w21"], raw["b21"],
                  raw["w22"], raw["b22"], raw["bn2"])     # (kernel stores h1 as bf16)

    nb = int(np.max(batch_ids)) + 1
    sums, maxs = [], []
    for g in range(nb):
        idx = np.where(batch_ids == g)[0]
        sums.append(v[idx].sum(axis=0))
        maxs.append(v[idx].max(axis=0))
    pooled = jnp.concatenate([jnp.stack(sums), jnp.stack(maxs)], axis=1)
    logits = dot(pooled, raw["wf"]) + raw["bf"]           # fc2 stays f32 in-kernel
    return jax.nn.log_softmax(logits, axis=1)


# ---------------------------------------------------------------------------
# Deterministic synthetic parameters (PyTorch-style init), then padding
# ---------------------------------------------------------------------------
def _make_linear(key, fan_in, fan_out):
    kw, kb = jax.random.split(key)
    bound = 1.0 / np.sqrt(fan_in)
    w = jax.random.uniform(kw, (fan_in, fan_out), jnp.float32, -bound, bound)
    b = jax.random.uniform(kb, (fan_out,), jnp.float32, -bound, bound)
    return w, b


def _make_bn(key, dim):
    kg, kb, km, kv = jax.random.split(key, 4)
    gamma = jax.random.uniform(kg, (dim,), jnp.float32, 0.5, 1.5)
    beta = jax.random.uniform(kb, (dim,), jnp.float32, -0.5, 0.5)
    mean = jax.random.uniform(km, (dim,), jnp.float32, -1.0, 1.0)
    var = jax.random.uniform(kv, (dim,), jnp.float32, 0.5, 1.5)
    return gamma, beta, mean, var


def init_raw_params(key):
    ks = jax.random.split(key, 9)
    raw = {}
    raw["w11"], raw["b11"] = _make_linear(ks[0], NUM_FEATURES, HID)
    raw["w12"], raw["b12"] = _make_linear(ks[1], HID, HID)
    raw["bn1"] = _make_bn(ks[2], HID)
    raw["w21"], raw["b21"] = _make_linear(ks[3], HID, HID)
    raw["w22"], raw["b22"] = _make_linear(ks[4], HID, HID)
    raw["bn2"] = _make_bn(ks[5], HID)
    raw["wf"], raw["bf"] = _make_linear(ks[6], 2 * HID, NCLASS)
    raw["eps1"] = float(jax.random.uniform(ks[7], (), jnp.float32, -0.2, 0.2))
    raw["eps2"] = float(jax.random.uniform(ks[8], (), jnp.float32, -0.2, 0.2))
    return raw


def pad_params(raw):
    def pad2(w, r, c, dtype=jnp.float32):
        out = jnp.zeros((r, c), jnp.float32).at[:w.shape[0], :w.shape[1]].set(w)
        return out.astype(dtype)

    def pad_row(v, c):
        return jnp.zeros((1, c), jnp.float32).at[0, :v.shape[0]].set(v)

    def fold_bn(bn):
        gamma, beta, mean, var = bn
        scale = gamma / jnp.sqrt(var + BN_EPS)
        shift = beta - mean * scale
        # padded channels get scale = shift = 0 so they stay exactly zero
        return pad_row(scale, HID_PAD), pad_row(shift, HID_PAD)

    p = {}
    p["w11"] = pad2(raw["w11"], FIN_PAD, HID_PAD, jnp.bfloat16)   # MXU weights in bf16
    p["b11"] = pad_row(raw["b11"], HID_PAD)
    p["w12"] = pad2(raw["w12"], HID_PAD, HID_PAD, jnp.bfloat16)
    p["b12"] = pad_row(raw["b12"], HID_PAD)
    p["bn1_scale"], p["bn1_shift"] = fold_bn(raw["bn1"])
    p["w21"] = pad2(raw["w21"], HID_PAD, HID_PAD, jnp.bfloat16)
    p["b21"] = pad_row(raw["b21"], HID_PAD)
    p["w22"] = pad2(raw["w22"], HID_PAD, HID_PAD, jnp.bfloat16)
    p["b22"] = pad_row(raw["b22"], HID_PAD)
    p["bn2_scale"], p["bn2_shift"] = fold_bn(raw["bn2"])
    wf = jnp.zeros((2 * HID_PAD, NCLASS), jnp.float32)
    wf = wf.at[:HID, :].set(raw["wf"][:HID, :])                     # add-pool half
    wf = wf.at[HID_PAD:HID_PAD + HID, :].set(raw["wf"][HID:, :])    # max-pool half
    p["wf"] = wf
    p["bf"] = raw["bf"].reshape(1, NCLASS)
    p["eps1"] = raw["eps1"]
    p["eps2"] = raw["eps2"]
    return p


if __name__ == "__main__":
    key = jax.random.PRNGKey(0)
    k_x, k_p = jax.random.split(key)

    # Three synthetic ring graphs (96, 80, 150 nodes) -> N = 326, padded to 512,
    # giving two row tiles: exercises the multi-tile partial pooling (including
    # tiles where a graph has no member nodes) and the cross-tile head reduce.
    graph_sizes = [96, 80, 150]
    batch_ids = np.concatenate(
        [np.full(s, g, np.int32) for g, s in enumerate(graph_sizes)])
    n = int(batch_ids.shape[0])
    nb = len(graph_sizes)

    src, dst = [], []
    off = 0
    for s in graph_sizes:
        for i in range(s):
            a_node, b_node = off + i, off + (i + 1) % s
            src += [a_node, b_node]
            dst += [b_node, a_node]
        off += s
    adj_np = np.zeros((n, n), np.float32)
    np.add.at(adj_np, (np.array(dst), np.array(src)), 1.0)   # A[dst, src] += 1
    adj = jnp.asarray(adj_np)

    onehot = jnp.asarray(
        (batch_ids[None, :] == np.arange(nb)[:, None]).astype(np.float32))  # (B, N)

    x = jax.random.normal(k_x, (n, NUM_FEATURES), jnp.float32)

    raw = init_raw_params(k_p)
    params = pad_params(raw)

    out = gin_net_forward(x, adj, onehot, params)
    out = jax.block_until_ready(out)

    # Validate against a reference that mirrors the kernels' bf16-operand /
    # f32-accumulate precision policy (remaining diffs: f32 accumulation order).
    ref = reference_forward(x, adj, batch_ids, raw, mxu_bf16=True)
    np.testing.assert_allclose(np.asarray(out), np.asarray(ref),
                               rtol=2e-3, atol=2e-3)

    print("KERNEL_OK")
</pallas_src>

<mosaic_0001>
module attributes {stable_mosaic.version = 11 : i64} {
  func.func @gin_layer_kernel(%arg0: i32, %arg1: memref<512x16xbf16, #tpu.memory_space<vmem>>, %arg2: memref<256x512xbf16, #tpu.memory_space<vmem>>, %arg3: memref<16x256xbf16, #tpu.memory_space<vmem>>, %arg4: memref<1x256xf32, #tpu.memory_space<vmem>>, %arg5: memref<256x256xbf16, #tpu.memory_space<vmem>>, %arg6: memref<1x256xf32, #tpu.memory_space<vmem>>, %arg7: memref<1x256xf32, #tpu.memory_space<vmem>>, %arg8: memref<1x256xf32, #tpu.memory_space<vmem>>, %arg9: memref<256x256xbf16, #tpu.memory_space<vmem>>) attributes {dimension_semantics = [#tpu.dimension_semantics<parallel>], iteration_bounds = array<i64: 2>, scalar_prefetch = 0 : i64, scratch_operands = 0 : i64, tpu.core_type = #tpu.core_type<tc>, window_params = [{pipeline_mode = #tpu.pipeline_mode<synchronous>, transform_indices = @transform_0, window_bounds = array<i64: 512, 16>}, {transform_indices = @transform_1, window_bounds = array<i64: 256, 512>}, {pipeline_mode = #tpu.pipeline_mode<synchronous>, transform_indices = @transform_2, window_bounds = array<i64: 16, 256>}, {pipeline_mode = #tpu.pipeline_mode<synchronous>, transform_indices = @transform_3, window_bounds = array<i64: 1, 256>}, {pipeline_mode = #tpu.pipeline_mode<synchronous>, transform_indices = @transform_4, window_bounds = array<i64: 256, 256>}, {pipeline_mode = #tpu.pipeline_mode<synchronous>, transform_indices = @transform_5, window_bounds = array<i64: 1, 256>}, {pipeline_mode = #tpu.pipeline_mode<synchronous>, transform_indices = @transform_6, window_bounds = array<i64: 1, 256>}, {pipeline_mode = #tpu.pipeline_mode<synchronous>, transform_indices = @transform_7, window_bounds = array<i64: 1, 256>}, {transform_indices = @transform_8, window_bounds = array<i64: 256, 256>}]} {
    %c256_i32 = arith.constant 256 : i32
    %0 = arith.muli %arg0, %c256_i32 : i32
    %1 = tpu.assume_multiple %0, 256 : i32
    %2 = arith.index_cast %1 : i32 to index
    %c0 = arith.constant 0 : index
    %3 = vector.load %arg1[%2, %c0] : memref<512x16xbf16, #tpu.memory_space<vmem>>, vector<256x16xbf16>
    %4 = arith.extf %3 : vector<256x16xbf16> to vector<256x16xf32>
    %cst = arith.constant 0.805720984 : f32
    %5 = vector.broadcast %cst : f32 to vector<256x16xf32>
    %6 = arith.mulf %5, %4 : vector<256x16xf32>
    %c0_0 = arith.constant 0 : index
    %c0_1 = arith.constant 0 : index
    %7 = vector.load %arg2[%c0_0, %c0_1] : memref<256x512xbf16, #tpu.memory_space<vmem>>, vector<256x512xbf16>
    %c0_2 = arith.constant 0 : index
    %c0_3 = arith.constant 0 : index
    %8 = vector.load %arg1[%c0_2, %c0_3] : memref<512x16xbf16, #tpu.memory_space<vmem>>, vector<512x16xbf16>
    %cst_4 = arith.constant dense<0.000000e+00> : vector<256x16xf32>
    %9 = tpu.matmul %7, %8, %cst_4 {dimension_numbers = #tpu.dot_dimension_numbers<[1], [0], [0], [1], [0, 0, 1, 1], [], []>} : vector<256x512xbf16>, vector<512x16xbf16>, vector<256x16xf32> -> vector<256x16xf32>
    %10 = arith.addf %6, %9 : vector<256x16xf32>
    %11 = arith.truncf %10 : vector<256x16xf32> to vector<256x16xbf16>
    %c0_5 = arith.constant 0 : index
    %c0_6 = arith.constant 0 : index
    %12 = vector.load %arg3[%c0_5, %c0_6] : memref<16x256xbf16, #tpu.memory_space<vmem>>, vector<16x256xbf16>
    %cst_7 = arith.constant dense<0.000000e+00> : vector<256x256xf32>
    %13 = tpu.matmul %11, %12, %cst_7 {dimension_numbers = #tpu.dot_dimension_numbers<[1], [0], [0], [1], [0, 0, 1, 1], [], []>} : vector<256x16xbf16>, vector<16x256xbf16>, vector<256x256xf32> -> vector<256x256xf32>
    %c0_8 = arith.constant 0 : index
    %c0_9 = arith.constant 0 : index
    %14 = vector.load %arg4[%c0_8, %c0_9] : memref<1x256xf32, #tpu.memory_space<vmem>>, vector<1x256xf32>
    %15 = vector.broadcast %14 : vector<1x256xf32> to vector<256x256xf32>
    %16 = arith.addf %13, %15 : vector<256x256xf32>
    %cst_10 = arith.constant 0.000000e+00 : f32
    %17 = vector.broadcast %cst_10 : f32 to vector<256x256xf32>
    %18 = arith.maximumf %16, %17 : vector<256x256xf32>
    %19 = arith.truncf %18 : vector<256x256xf32> to vector<256x256xbf16>
    %c0_11 = arith.constant 0 : index
    %c0_12 = arith.constant 0 : index
    %20 = vector.load %arg5[%c0_11, %c0_12] : memref<256x256xbf16, #tpu.memory_space<vmem>>, vector<256x256xbf16>
    %cst_13 = arith.constant dense<0.000000e+00> : vector<256x256xf32>
    %21 = tpu.matmul %19, %20, %cst_13 {dimension_numbers = #tpu.dot_dimension_numbers<[1], [0], [0], [1], [0, 0, 1, 1], [], []>} : vector<256x256xbf16>, vector<256x256xbf16>, vector<256x256xf32> -> vector<256x256xf32>
    %c0_14 = arith.constant 0 : index
    %c0_15 = arith.constant 0 : index
    %22 = vector.load %arg6[%c0_14, %c0_15] : memref<1x256xf32, #tpu.memory_space<vmem>>, vector<1x256xf32>
    %23 = vector.broadcast %22 : vector<1x256xf32> to vector<256x256xf32>
    %24 = arith.addf %21, %23 : vector<256x256xf32>
    %cst_16 = arith.constant 0.000000e+00 : f32
    %25 = vector.broadcast %cst_16 : f32 to vector<256x256xf32>
    %26 = arith.maximumf %24, %25 : vector<256x256xf32>
    %c0_17 = arith.constant 0 : index
    %c0_18 = arith.constant 0 : index
    %27 = vector.load %arg7[%c0_17, %c0_18] : memref<1x256xf32, #tpu.memory_space<vmem>>, vector<1x256xf32>
    %28 = vector.broadcast %27 : vector<1x256xf32> to vector<256x256xf32>
    %29 = arith.mulf %26, %28 : vector<256x256xf32>
    %c0_19 = arith.constant 0 : index
    %c0_20 = arith.constant 0 : index
    %30 = vector.load %arg8[%c0_19, %c0_20] : memref<1x256xf32, #tpu.memory_space<vmem>>, vector<1x256xf32>
    %31 = vector.broadcast %30 : vector<1x256xf32> to vector<256x256xf32>
    %32 = arith.addf %29, %31 : vector<256x256xf32>
    %33 = arith.truncf %32 : vector<256x256xf32> to vector<256x256xbf16>
    %c0_21 = arith.constant 0 : index
    %c0_22 = arith.constant 0 : index
    %34 = vector.load %arg9[%c0_21, %c0_22] : memref<256x256xbf16, #tpu.memory_space<vmem>>, vector<256x256xbf16>
    tpu.vector_store %arg9[%c0_21, %c0_22], %33 {strides = array<i32>} : memref<256x256xbf16, #tpu.memory_space<vmem>>, vector<256x256xbf16>,
    return
  }
  func.func @transform_0(%arg0: i32) -> (i32, i32) {
    %c0_i32 = arith.constant 0 : i32
    %c0_i32_0 = arith.constant 0 : i32
    %c0_i32_1 = arith.constant 0 : i32
    return %c0_i32, %c0_i32_0 : i32, i32
  }
  func.func @transform_1(%arg0: i32) -> (i32, i32) {
    %c0_i32 = arith.constant 0 : i32
    %c0_i32_0 = arith.constant 0 : i32
    return %arg0, %c0_i32 : i32, i32
  }
  func.func @transform_2(%arg0: i32) -> (i32, i32) {
    %c0_i32 = arith.constant 0 : i32
    %c0_i32_0 = arith.constant 0 : i32
    %c0_i32_1 = arith.constant 0 : i32
    return %c0_i32, %c0_i32_0 : i32, i32
  }
  func.func @transform_3(%arg0: i32) -> (i32, i32) {
    %c0_i32 = arith.constant 0 : i32
    %c0_i32_0 = arith.constant 0 : i32
    %c0_i32_1 = arith.constant 0 : i32
    return %c0_i32, %c0_i32_0 : i32, i32
  }
  func.func @transform_4(%arg0: i32) -> (i32, i32) {
    %c0_i32 = arith.constant 0 : i32
    %c0_i32_0 = arith.constant 0 : i32
    %c0_i32_1 = arith.constant 0 : i32
    return %c0_i32, %c0_i32_0 : i32, i32
  }
  func.func @transform_5(%arg0: i32) -> (i32, i32) {
    %c0_i32 = arith.constant 0 : i32
    %c0_i32_0 = arith.constant 0 : i32
    %c0_i32_1 = arith.constant 0 : i32
    return %c0_i32, %c0_i32_0 : i32, i32
  }
  func.func @transform_6(%arg0: i32) -> (i32, i32) {
    %c0_i32 = arith.constant 0 : i32
    %c0_i32_0 = arith.constant 0 : i32
    %c0_i32_1 = arith.constant 0 : i32
    return %c0_i32, %c0_i32_0 : i32, i32
  }
  func.func @transform_7(%arg0: i32) -> (i32, i32) {
    %c0_i32 = arith.constant 0 : i32
    %c0_i32_0 = arith.constant 0 : i32
    %c0_i32_1 = arith.constant 0 : i32
    return %c0_i32, %c0_i32_0 : i32, i32
  }
  func.func @transform_8(%arg0: i32) -> (i32, i32) {
    %c0_i32 = arith.constant 0 : i32
    %c0_i32_0 = arith.constant 0 : i32
    return %arg0, %c0_i32 : i32, i32
  }
}

</mosaic_0001>

<llo_original>
// kernel: tpu_custom_call.1
$region0: #{tpu_custom_call.1}
  #allocation0 [shape = 'u32[]', space=smem, size = 0x4, offset = 0x4, fixed_abs, tag = 'smem constant byte address 0x4 - core index']
  #allocation1 [shape = 'u32[144,128]{1,0:T(1,128)}', space=vmem, size = 0x12000, scoped, tag = 'internal scratch']
  %s0 = inlined_call_operand.vmem [shape: bf16[512,16], index: 0, kind: input, shape index: {}]
  %s1 = inlined_call_operand.hbm [shape: bf16[512,512], index: 1, kind: input, shape index: {}]
  %s2 = inlined_call_operand.vmem [shape: bf16[16,256], index: 2, kind: input, shape index: {}]
  %s3 = inlined_call_operand.vmem [shape: f32[1,256], index: 3, kind: input, shape index: {}]
  %s4 = inlined_call_operand.vmem [shape: bf16[256,256], index: 4, kind: input, shape index: {}]
  %s5 = inlined_call_operand.vmem [shape: f32[1,256], index: 5, kind: input, shape index: {}]
  %s6 = inlined_call_operand.vmem [shape: f32[1,256], index: 6, kind: input, shape index: {}]
  %s7 = inlined_call_operand.vmem [shape: f32[1,256], index: 7, kind: input, shape index: {}]
  %s8 = inlined_call_operand.hbm [shape: bf16[512,256], index: 8, kind: output, shape index: {}]
  %s9 = sld [smem:[#allocation0]]
  $region69: #{tpu_custom_call.1} parent=0
    _
  %s11 = ssub.s32 1, %s9
  %s12 = scalar_select 0, %s11, %s9
  $region1: #{tpu_custom_call.1} parent=0
    #allocation2 [shape = 'u8[524288]{0}', space=vmem, size = 0x80000, scoped, tag = 'input window, operand 1']
    #allocation3 [shape = 's32[2]{0}', space=sflag, size = 0x8, scoped, tag = 'scoped memory for tpu_custom_call.1']
    #allocation4 [shape = 's32[2]{0}', space=sflag, size = 0x8, scoped, tag = 'scoped memory for tpu_custom_call.1']
    #allocation5 [shape = 'u8[262144]{0}', space=vmem, size = 0x40000, scoped, tag = 'output window, operand 0']
    %13 = vsyncpa [#allocation3], 0
    %s14 = scalar_lea.sflag [#allocation3], 1
    %15 = vsyncpa %s14, 0
    %16 = vsyncpa [#allocation4], 0
    %s17 = scalar_lea.sflag [#allocation4], 1
    %18 = vsyncpa %s17, 0
    loop: start=0, step=1, limit=4
    $region2: #{tpu_custom_call.1} parent=1 // loop_pre_header
      _
    $region3: #{tpu_custom_call.1} parent=1 // loop_header
      %s20 = sphi 0, %s24
      %p21 = scmp.ge.s32.totalorder %s20, 4
      %s28 = sphi 0, %s28
      %s30 = sphi 0, %s28
      %s31 = sphi 0, %s30
      %s45 = sphi 0, %s31
      %s51 = sphi 0, %s53
      %s54 = sphi 0, %s51
      %s55 = sphi 0, %s54
      %s71 = sphi 0, %s55
      %s75 = sphi 0, %s75
      %s77 = sphi 0, %s75
      %s78 = sphi 0, %s77
      %s92 = sphi 0, %s78
      %s96 = sphi 0, %s96
      %s98 = sphi 0, %s96
      %s99 = sphi 0, %s98
      %s113 = sphi 0, %s99
      %s117 = sphi 0, %s117
      %s119 = sphi 0, %s117
      %s120 = sphi 0, %s119
      %s134 = sphi 0, %s120
      %s138 = sphi 0, %s138
      %s140 = sphi 0, %s138
      %s141 = sphi 0, %s140
      %s155 = sphi 0, %s141
      %s159 = sphi 0, %s159
      %s161 = sphi 0, %s159
      %s162 = sphi 0, %s161
      %s176 = sphi 0, %s162
      %s180 = sphi 0, %s180
      %s182 = sphi 0, %s180
      %s183 = sphi 0, %s182
      %s197 = sphi 0, %s183
      %s203 = sphi 0, %s205
      %s206 = sphi 0, %s203
      %s207 = sphi 0, %s206
      %s223 = sphi 0, %s207
    $region4: #{tpu_custom_call.1} parent=1 // loop_header_branch
      %23 = sbr.rel (%p21) target = $region8
    $region5: #{tpu_custom_call.1} parent=1 // loop_body
      %s25 = ssub.s32 %s20, 1
      %s26 = ssub.s32 %s20, 2
      %s27 = sadd.s32 %s20, 1
      %s29 = sadd.s32 %s28, 1
      %p32 = scmp.eq.s32.totalorder %s20, 1
      %p33 = scmp.ne.s32.totalorder %s28, %s30
      %p34 = scmp.eq.s32.totalorder %s20, 0
      %p35 = por %p33, %p34
      %p36 = scmp.ne.s32.totalorder %s28, %s30
      %p37 = scmp.eq.s32.totalorder %s25, 1
      %p38 = por %p36, %p37
      %p39 = scmp.ne.s32.totalorder %s30, %s31
      %p40 = scmp.eq.s32.totalorder %s25, 0
      %p41 = por %p39, %p40
      %p42 = scmp.ne.s32.totalorder %s30, %s31
      %p43 = scmp.eq.s32.totalorder %s26, 1
      %p44 = por %p42, %p43
      %p46 = scmp.ne.s32.totalorder %s31, %s45
      %p47 = scmp.eq.s32.totalorder %s26, 0
      %p48 = por %p46, %p47
      %s49 = ssub.s32 %s20, %s27
      %p50 = scmp.eq.s32.totalorder %s49, 0
      %s52 = sadd.s32 %s51, 1
      %s53 = scalar_select %p50, %s51, %s52
      %p56 = pneg %p50
      %p57 = scmp.eq.s32.totalorder %s20, 1
      %p58 = por %p56, %p57
      %p59 = scmp.ne.s32.totalorder %s51, %s54
      %p60 = scmp.eq.s32.totalorder %s20, 0
      %p61 = por %p59, %p60
      %p62 = scmp.ne.s32.totalorder %s51, %s54
      %p63 = scmp.eq.s32.totalorder %s25, 1
      %p64 = por %p62, %p63
      %p65 = scmp.ne.s32.totalorder %s54, %s55
      %p66 = scmp.eq.s32.totalorder %s25, 0
      %p67 = por %p65, %p66
      %p68 = scmp.ne.s32.totalorder %s54, %s55
      %p69 = scmp.eq.s32.totalorder %s26, 1
      %p70 = por %p68, %p69
      %p72 = scmp.ne.s32.totalorder %s55, %s71
      %p73 = scmp.eq.s32.totalorder %s26, 0
      %p74 = por %p72, %p73
      %s76 = sadd.s32 %s75, 1
      %p79 = scmp.eq.s32.totalorder %s20, 1
      %p80 = scmp.ne.s32.totalorder %s75, %s77
      %p81 = scmp.eq.s32.totalorder %s20, 0
      %p82 = por %p80, %p81
      %p83 = scmp.ne.s32.totalorder %s75, %s77
      %p84 = scmp.eq.s32.totalorder %s25, 1
      %p85 = por %p83, %p84
      %p86 = scmp.ne.s32.totalorder %s77, %s78
      %p87 = scmp.eq.s32.totalorder %s25, 0
      %p88 = por %p86, %p87
      %p89 = scmp.ne.s32.totalorder %s77, %s78
      %p90 = scmp.eq.s32.totalorder %s26, 1
      %p91 = por %p89, %p90
      %p93 = scmp.ne.s32.totalorder %s78, %s92
      %p94 = scmp.eq.s32.totalorder %s26, 0
      %p95 = por %p93, %p94
      %s97 = sadd.s32 %s96, 1
      %p100 = scmp.eq.s32.totalorder %s20, 1
      %p101 = scmp.ne.s32.totalorder %s96, %s98
      %p102 = scmp.eq.s32.totalorder %s20, 0
      %p103 = por %p101, %p102
      %p104 = scmp.ne.s32.totalorder %s96, %s98
      %p105 = scmp.eq.s32.totalorder %s25, 1
      %p106 = por %p104, %p105
      %p107 = scmp.ne.s32.totalorder %s98, %s99
      %p108 = scmp.eq.s32.totalorder %s25, 0
      %p109 = por %p107, %p108
      %p110 = scmp.ne.s32.totalorder %s98, %s99
      %p111 = scmp.eq.s32.totalorder %s26, 1
      %p112 = por %p110, %p111
      %p114 = scmp.ne.s32.totalorder %s99, %s113
      %p115 = scmp.eq.s32.totalorder %s26, 0
      %p116 = por %p114, %p115
      %s118 = sadd.s32 %s117, 1
      %p121 = scmp.eq.s32.totalorder %s20, 1
      %p122 = scmp.ne.s32.totalorder %s117, %s119
      %p123 = scmp.eq.s32.totalorder %s20, 0
      %p124 = por %p122, %p123
      %p125 = scmp.ne.s32.totalorder %s117, %s119
      %p126 = scmp.eq.s32.totalorder %s25, 1
      %p127 = por %p125, %p126
      %p128 = scmp.ne.s32.totalorder %s119, %s120
      %p129 = scmp.eq.s32.totalorder %s25, 0
      %p130 = por %p128, %p129
      %p131 = scmp.ne.s32.totalorder %s119, %s120
      %p132 = scmp.eq.s32.totalorder %s26, 1
      %p133 = por %p131, %p132
      %p135 = scmp.ne.s32.totalorder %s120, %s134
      %p136 = scmp.eq.s32.totalorder %s26, 0
      %p137 = por %p135, %p136
      %s139 = sadd.s32 %s138, 1
      %p142 = scmp.eq.s32.totalorder %s20, 1
      %p143 = scmp.ne.s32.totalorder %s138, %s140
      %p144 = scmp.eq.s32.totalorder %s20, 0
      %p145 = por %p143, %p144
      %p146 = scmp.ne.s32.totalorder %s138, %s140
      %p147 = scmp.eq.s32.totalorder %s25, 1
      %p148 = por %p146, %p147
      %p149 = scmp.ne.s32.totalorder %s140, %s141
      %p150 = scmp.eq.s32.totalorder %s25, 0
      %p151 = por %p149, %p150
      %p152 = scmp.ne.s32.totalorder %s140, %s141
      %p153 = scmp.eq.s32.totalorder %s26, 1
      %p154 = por %p152, %p153
      %p156 = scmp.ne.s32.totalorder %s141, %s155
      %p157 = scmp.eq.s32.totalorder %s26, 0
      %p158 = por %p156, %p157
      %s160 = sadd.s32 %s159, 1
      %p163 = scmp.eq.s32.totalorder %s20, 1
      %p164 = scmp.ne.s32.totalorder %s159, %s161
      %p165 = scmp.eq.s32.totalorder %s20, 0
      %p166 = por %p164, %p165
      %p167 = scmp.ne.s32.totalorder %s159, %s161
      %p168 = scmp.eq.s32.totalorder %s25, 1
      %p169 = por %p167, %p168
      %p170 = scmp.ne.s32.totalorder %s161, %s162
      %p171 = scmp.eq.s32.totalorder %s25, 0
      %p172 = por %p170, %p171
      %p173 = scmp.ne.s32.totalorder %s161, %s162
      %p174 = scmp.eq.s32.totalorder %s26, 1
      %p175 = por %p173, %p174
      %p177 = scmp.ne.s32.totalorder %s162, %s176
      %p178 = scmp.eq.s32.totalorder %s26, 0
      %p179 = por %p177, %p178
      %s181 = sadd.s32 %s180, 1
      %p184 = scmp.eq.s32.totalorder %s20, 1
      %p185 = scmp.ne.s32.totalorder %s180, %s182
      %p186 = scmp.eq.s32.totalorder %s20, 0
      %p187 = por %p185, %p186
      %p188 = scmp.ne.s32.totalorder %s180, %s182
      %p189 = scmp.eq.s32.totalorder %s25, 1
      %p190 = por %p188, %p189
      %p191 = scmp.ne.s32.totalorder %s182, %s183
      %p192 = scmp.eq.s32.totalorder %s25, 0
      %p193 = por %p191, %p192
      %p194 = scmp.ne.s32.totalorder %s182, %s183
      %p195 = scmp.eq.s32.totalorder %s26, 1
      %p196 = por %p194, %p195
      %p198 = scmp.ne.s32.totalorder %s183, %s197
      %p199 = scmp.eq.s32.totalorder %s26, 0
      %p200 = por %p198, %p199
      %s201 = ssub.s32 %s20, %s27
      %p202 = scmp.eq.s32.totalorder %s201, 0
      %s204 = sadd.s32 %s203, 1
      %s205 = scalar_select %p202, %s203, %s204
      %p208 = pneg %p202
      %p209 = scmp.eq.s32.totalorder %s20, 1
      %p210 = por %p208, %p209
      %p211 = scmp.ne.s32.totalorder %s203, %s206
      %p212 = scmp.eq.s32.totalorder %s20, 0
      %p213 = por %p211, %p212
      %p214 = scmp.ne.s32.totalorder %s203, %s206
      %p215 = scmp.eq.s32.totalorder %s25, 1
      %p216 = por %p214, %p215
      %p217 = scmp.ne.s32.totalorder %s206, %s207
      %p218 = scmp.eq.s32.totalorder %s25, 0
      %p219 = por %p217, %p218
      %p220 = scmp.ne.s32.totalorder %s206, %s207
      %p221 = scmp.eq.s32.totalorder %s26, 1
      %p222 = por %p220, %p221
      %p224 = scmp.ne.s32.totalorder %s207, %s223
      %p225 = scmp.eq.s32.totalorder %s26, 0
      %p226 = por %p224, %p225
      %p227 = scmp.le.s32.totalorder 1, %s20
      %p228 = scmp.lt.s32.totalorder %s20, 3
      %p229 = pnand %p227, %p228
      %p230 = pneg %p229
      // Predicated region
      $region9: #{tpu_custom_call.1} parent=5 // pred_check
        _
      $region10: #{tpu_custom_call.1} parent=5 // pred_check_branch
        %232 = sbr.rel (%p229) target = $region12
      $region11: #{tpu_custom_call.1} parent=5 // pred_region
        %s233 = ssub.s32 %s20, 1
        // Predicated region
        $region13: #{tpu_custom_call.1} parent=11 // pred_check
          %p234 = pneg %p41
        $region14: #{tpu_custom_call.1} parent=11 // pred_check_branch
          %236 = sbr.rel (%p234) target = $region16
        $region15: #{tpu_custom_call.1} parent=11 // pred_region
          _
        $region16: #{tpu_custom_call.1} parent=11 // pred_fallthru
          _
        // Predicated region
        $region17: #{tpu_custom_call.1} parent=11 // pred_check
          %p237 = pneg %p88
        $region18: #{tpu_custom_call.1} parent=11 // pred_check_branch
          %239 = sbr.rel (%p237) target = $region20
        $region19: #{tpu_custom_call.1} parent=11 // pred_region
          _
        $region20: #{tpu_custom_call.1} parent=11 // pred_fallthru
          _
        // Predicated region
        $region21: #{tpu_custom_call.1} parent=11 // pred_check
          %p240 = pneg %p109
        $region22: #{tpu_custom_call.1} parent=11 // pred_check_branch
          %242 = sbr.rel (%p240) target = $region24
        $region23: #{tpu_custom_call.1} parent=11 // pred_region
          _
        $region24: #{tpu_custom_call.1} parent=11 // pred_fallthru
          _
        // Predicated region
        $region25: #{tpu_custom_call.1} parent=11 // pred_check
          %p243 = pneg %p130
        $region26: #{tpu_custom_call.1} parent=11 // pred_check_branch
          %245 = sbr.rel (%p243) target = $region28
        $region27: #{tpu_custom_call.1} parent=11 // pred_region
          _
        $region28: #{tpu_custom_call.1} parent=11 // pred_fallthru
          _
        // Predicated region
        $region29: #{tpu_custom_call.1} parent=11 // pred_check
          %p246 = pneg %p151
        $region30: #{tpu_custom_call.1} parent=11 // pred_check_branch
          %248 = sbr.rel (%p246) target = $region32
        $region31: #{tpu_custom_call.1} parent=11 // pred_region
          _
        $region32: #{tpu_custom_call.1} parent=11 // pred_fallthru
          _
        // Predicated region
        $region33: #{tpu_custom_call.1} parent=11 // pred_check
          %p249 = pneg %p172
        $region34: #{tpu_custom_call.1} parent=11 // pred_check_branch
          %251 = sbr.rel (%p249) target = $region36
        $region35: #{tpu_custom_call.1} parent=11 // pred_region
          _
        $region36: #{tpu_custom_call.1} parent=11 // pred_fallthru
          _
        // Predicated region
        $region37: #{tpu_custom_call.1} parent=11 // pred_check
          %p252 = pneg %p193
        $region38: #{tpu_custom_call.1} parent=11 // pred_check_branch
          %254 = sbr.rel (%p252) target = $region40
        $region39: #{tpu_custom_call.1} parent=11 // pred_region
          _
        $region40: #{tpu_custom_call.1} parent=11 // pred_fallthru
          _
      $region12: #{tpu_custom_call.1} parent=5 // pred_fallthru
        _
      %p255 = scmp.lt.s32.totalorder %s20, 2
      // Predicated region
      $region41: #{tpu_custom_call.1} parent=5 // pred_check
        %p256 = pneg %p255
      $region42: #{tpu_custom_call.1} parent=5 // pred_check_branch
        %258 = sbr.rel (%p256) target = $region44
      $region43: #{tpu_custom_call.1} parent=5 // pred_region
        // Predicated region
        $region45: #{tpu_custom_call.1} parent=43 // pred_check
          %p259 = pneg %p61
        $region46: #{tpu_custom_call.1} parent=43 // pred_check_branch
          %261 = sbr.rel (%p259) target = $region48
        $region47: #{tpu_custom_call.1} parent=43 // pred_region
          %s262 = sand.u32 %s51, 1
          %s263 = scalar_lea.sflag [#allocation3], %s262
          %s264 = sand.u32 %s51, 1
          %s265 = smul.addr %s264, 512
          %s266 = scalar_lea.vmem [#allocation2], %s265
          %s267 = smul.u32 32, %s20
          %s269 = ssub.s32 8192, 8192
          %270 = vsyncadd %s263, %s269
          %s271 = smul.addr %s267, 4
          %s272 = smul.addr %s271, 64
          %s273 = scalar_lea.hbm %s1, %s272
          %s274 = sshll.u32 %s266, 4
          %s275 = int_to_ptr.vmem [resolvable:$true] %s274
          %280 = dma.hbm_to_vmem [thread:$0]  %s273, 8192, %s275, %s263, 256, 256, 16
        $region48: #{tpu_custom_call.1} parent=43 // pred_fallthru
          _
      $region44: #{tpu_custom_call.1} parent=5 // pred_fallthru
        _
      %p281 = scmp.le.s32.totalorder 1, %s20
      %p282 = scmp.lt.s32.totalorder %s20, 3
      %p283 = pnand %p281, %p282
      %p284 = pneg %p283
      // Predicated region
      $region49: #{tpu_custom_call.1} parent=5 // pred_check
        _
      $region50: #{tpu_custom_call.1} parent=5 // pred_check_branch
        %286 = sbr.rel (%p283) target = $region52
      $region51: #{tpu_custom_call.1} parent=5 // pred_region
        %s287 = ssub.s32 %s20, 1
        %s288 = sand.u32 %s54, 1
        %s289 = scalar_lea.sflag [#allocation3], %s288
        %s290 = sand.u32 %s54, 1
        %s291 = smul.addr %s290, 512
        %s292 = scalar_lea.vmem [#allocation2], %s291
        // Predicated region
        $region53: #{tpu_custom_call.1} parent=51 // pred_check
          %p293 = pneg %p67
        $region54: #{tpu_custom_call.1} parent=51 // pred_check_branch
          %295 = sbr.rel (%p293) target = $region56
        $region55: #{tpu_custom_call.1} parent=51 // pred_region
          %296 = dma.done %s289, 8192
        $region56: #{tpu_custom_call.1} parent=51 // pred_fallthru
          _
        %p297 = pneg %p41
        %p298 = pneg %p38
        %s299 = sand.u32 %s54, 1
        %s300 = scalar_lea.sflag [#allocation3], %s299
        %s301 = sand.u32 %s54, 1
        %s302 = smul.addr %s301, 512
        %s303 = scalar_lea.vmem [#allocation2], %s302
        %p304 = pneg %p67
        %p305 = pneg %p64
        %p306 = pneg %p88
        %p307 = pneg %p85
        %p308 = pneg %p109
        %p309 = pneg %p106
        %p310 = pneg %p130
        %p311 = pneg %p127
        %p312 = pneg %p151
        %p313 = pneg %p148
        %p314 = pneg %p172
        %p315 = pneg %p169
        %p316 = pneg %p193
        %p317 = pneg %p190
        %p318 = pneg %p219
        %p319 = pneg %p216
        %s320 = sand.u32 %s206, 1
        %s321 = scalar_lea.sflag [#allocation4], %s320
        %s322 = sand.u32 %s206, 1
        %s323 = smul.addr %s322, 256
        %s324 = scalar_lea.vmem [#allocation5], %s323
        %s325 = smul.u32 32, %s25
        %s326 = smul.u32 32, %s25
        %s328 = smul.u32 %s25, 256
        %s329 = sshra.s32 %s328, 3
        %s330 = sand.u32 %s328, 7
        %s331 = smul.addr %s329, 4
        %s332 = scalar_lea.vmem %s0, %s331
        %v333 = vld [vmem:[%s332] sm:$0xf]
        %v334 = vld [vmem:[%s332 + $0x4] sm:$0xf]
        %v335 = vld [vmem:[%s332 + $0x8] sm:$0xf]
        %v336 = vld [vmem:[%s332 + $0xc] sm:$0xf]
        %v337 = vld [vmem:[%s332 + $0x10] sm:$0xf]
        %v338 = vld [vmem:[%s332 + $0x14] sm:$0xf]
        %v339 = vld [vmem:[%s332 + $0x18] sm:$0xf]
        %v340 = vld [vmem:[%s332 + $0x1c] sm:$0xf]
        %v341 = vld [vmem:[%s332 + $0x20] sm:$0xf]
        %v342 = vld [vmem:[%s332 + $0x24] sm:$0xf]
        %v343 = vld [vmem:[%s332 + $0x28] sm:$0xf]
        %v344 = vld [vmem:[%s332 + $0x2c] sm:$0xf]
        %v345 = vld [vmem:[%s332 + $0x30] sm:$0xf]
        %v346 = vld [vmem:[%s332 + $0x34] sm:$0xf]
        %v347 = vld [vmem:[%s332 + $0x38] sm:$0xf]
        %v348 = vld [vmem:[%s332 + $0x3c] sm:$0xf]
        %v349 = vld [vmem:[%s332 + $0x40] sm:$0xf]
        %v350 = vld [vmem:[%s332 + $0x44] sm:$0xf]
        %v351 = vld [vmem:[%s332 + $0x48] sm:$0xf]
        %v352 = vld [vmem:[%s332 + $0x4c] sm:$0xf]
        %v353 = vld [vmem:[%s332 + $0x50] sm:$0xf]
        %v354 = vld [vmem:[%s332 + $0x54] sm:$0xf]
        %v355 = vld [vmem:[%s332 + $0x58] sm:$0xf]
        %v356 = vld [vmem:[%s332 + $0x5c] sm:$0xf]
        %v357 = vld [vmem:[%s332 + $0x60] sm:$0xf]
        %v358 = vld [vmem:[%s332 + $0x64] sm:$0xf]
        %v359 = vld [vmem:[%s332 + $0x68] sm:$0xf]
        %v360 = vld [vmem:[%s332 + $0x6c] sm:$0xf]
        %v361 = vld [vmem:[%s332 + $0x70] sm:$0xf]
        %v362 = vld [vmem:[%s332 + $0x74] sm:$0xf]
        %v363 = vld [vmem:[%s332 + $0x78] sm:$0xf]
        %v364 = vld [vmem:[%s332 + $0x7c] sm:$0xf]
        %v365 = vunpack.c.l.bf16 %v333
        %v366 = vunpack.c.l.bf16 %v334
        %v367 = vunpack.c.l.bf16 %v335
        %v368 = vunpack.c.l.bf16 %v336
        %v369 = vunpack.c.l.bf16 %v337
        %v370 = vunpack.c.l.bf16 %v338
        %v371 = vunpack.c.l.bf16 %v339
        %v372 = vunpack.c.l.bf16 %v340
        %v373 = vunpack.c.l.bf16 %v341
        %v374 = vunpack.c.l.bf16 %v342
        %v375 = vunpack.c.l.bf16 %v343
        %v376 = vunpack.c.l.bf16 %v344
        %v377 = vunpack.c.l.bf16 %v345
        %v378 = vunpack.c.l.bf16 %v346
        %v379 = vunpack.c.l.bf16 %v347
        %v380 = vunpack.c.l.bf16 %v348
        %v381 = vunpack.c.l.bf16 %v349
        %v382 = vunpack.c.l.bf16 %v350
        %v383 = vunpack.c.l.bf16 %v351
        %v384 = vunpack.c.l.bf16 %v352
        %v385 = vunpack.c.l.bf16 %v353
        %v386 = vunpack.c.l.bf16 %v354
        %v387 = vunpack.c.l.bf16 %v355
        %v388 = vunpack.c.l.bf16 %v356
        %v389 = vunpack.c.l.bf16 %v357
        %v390 = vunpack.c.l.bf16 %v358
        %v391 = vunpack.c.l.bf16 %v359
        %v392 = vunpack.c.l.bf16 %v360
        %v393 = vunpack.c.l.bf16 %v361
        %v394 = vunpack.c.l.bf16 %v362
        %v395 = vunpack.c.l.bf16 %v363
        %v396 = vunpack.c.l.bf16 %v364
        %v397 = vmul.f32 %v365, 0.805721
        %v398 = vmul.f32 %v366, 0.805721
        %v399 = vmul.f32 %v367, 0.805721
        %v400 = vmul.f32 %v368, 0.805721
        %v401 = vmul.f32 %v369, 0.805721
        %v402 = vmul.f32 %v370, 0.805721
        %v403 = vmul.f32 %v371, 0.805721
        %v404 = vmul.f32 %v372, 0.805721
        %v405 = vmul.f32 %v373, 0.805721
        %v406 = vmul.f32 %v374, 0.805721
        %v407 = vmul.f32 %v375, 0.805721
        %v408 = vmul.f32 %v376, 0.805721
        %v409 = vmul.f32 %v377, 0.805721
        %v410 = vmul.f32 %v378, 0.805721
        %v411 = vmul.f32 %v379, 0.805721
        %v412 = vmul.f32 %v380, 0.805721
        %v413 = vmul.f32 %v381, 0.805721
        %v414 = vmul.f32 %v382, 0.805721
        %v415 = vmul.f32 %v383, 0.805721
        %v416 = vmul.f32 %v384, 0.805721
        %v417 = vmul.f32 %v385, 0.805721
        %v418 = vmul.f32 %v386, 0.805721
        %v419 = vmul.f32 %v387, 0.805721
        %v420 = vmul.f32 %v388, 0.805721
        %v421 = vmul.f32 %v389, 0.805721
        %v422 = vmul.f32 %v390, 0.805721
        %v423 = vmul.f32 %v391, 0.805721
        %v424 = vmul.f32 %v392, 0.805721
        %v425 = vmul.f32 %v393, 0.805721
        %v426 = vmul.f32 %v394, 0.805721
        %v427 = vmul.f32 %v395, 0.805721
        %v428 = vmul.f32 %v396, 0.805721
        %v429 = vld [vmem:[%s292] sm:$0xff]
        %v430 = vld [vmem:[%s292 + $0x8] sm:$0xff]
        %v431 = vld [vmem:[%s292 + $0x10] sm:$0xff]
        %v432 = vld [vmem:[%s292 + $0x18] sm:$0xff]
        %v433 = vld [vmem:[%s292 + $0x20] sm:$0xff]
        %v434 = vld [vmem:[%s292 + $0x28] sm:$0xff]
        %v435 = vld [vmem:[%s292 + $0x30] sm:$0xff]
        %v436 = vld [vmem:[%s292 + $0x38] sm:$0xff]
        %v437 = vld [vmem:[%s292 + $0x40] sm:$0xff]
        %v438 = vld [vmem:[%s292 + $0x48] sm:$0xff]
        %v439 = vld [vmem:[%s292 + $0x50] sm:$0xff]
        %v440 = vld [vmem:[%s292 + $0x58] sm:$0xff]
        %v441 = vld [vmem:[%s292 + $0x60] sm:$0xff]
        %v442 = vld [vmem:[%s292 + $0x68] sm:$0xff]
        %v443 = vld [vmem:[%s292 + $0x70] sm:$0xff]
        %v444 = vld [vmem:[%s292 + $0x78] sm:$0xff]
        %v445 = vld [vmem:[%s292 + $0x80] sm:$0xff]
        %v446 = vld [vmem:[%s292 + $0x88] sm:$0xff]
        %v447 = vld [vmem:[%s292 + $0x90] sm:$0xff]
        %v448 = vld [vmem:[%s292 + $0x98] sm:$0xff]
        %v449 = vld [vmem:[%s292 + $0xa0] sm:$0xff]
        %v450 = vld [vmem:[%s292 + $0xa8] sm:$0xff]
        %v451 = vld [vmem:[%s292 + $0xb0] sm:$0xff]
        %v452 = vld [vmem:[%s292 + $0xb8] sm:$0xff]
        %v453 = vld [vmem:[%s292 + $0xc0] sm:$0xff]
        %v454 = vld [vmem:[%s292 + $0xc8] sm:$0xff]
        %v455 = vld [vmem:[%s292 + $0xd0] sm:$0xff]
        %v456 = vld [vmem:[%s292 + $0xd8] sm:$0xff]
        %v457 = vld [vmem:[%s292 + $0xe0] sm:$0xff]
        %v458 = vld [vmem:[%s292 + $0xe8] sm:$0xff]
        %v459 = vld [vmem:[%s292 + $0xf0] sm:$0xff]
        %v460 = vld [vmem:[%s292 + $0xf8] sm:$0xff]
        %v461 = vld [vmem:[%s292 + $0x100] sm:$0xff]
        %v462 = vld [vmem:[%s292 + $0x108] sm:$0xff]
        %v463 = vld [vmem:[%s292 + $0x110] sm:$0xff]
        %v464 = vld [vmem:[%s292 + $0x118] sm:$0xff]
        %v465 = vld [vmem:[%s292 + $0x120] sm:$0xff]
        %v466 = vld [vmem:[%s292 + $0x128] sm:$0xff]
        %v467 = vld [vmem:[%s292 + $0x130] sm:$0xff]
        %v468 = vld [vmem:[%s292 + $0x138] sm:$0xff]
        %v469 = vld [vmem:[%s292 + $0x140] sm:$0xff]
        %v470 = vld [vmem:[%s292 + $0x148] sm:$0xff]
        %v471 = vld [vmem:[%s292 + $0x150] sm:$0xff]
        %v472 = vld [vmem:[%s292 + $0x158] sm:$0xff]
        %v473 = vld [vmem:[%s292 + $0x160] sm:$0xff]
        %v474 = vld [vmem:[%s292 + $0x168] sm:$0xff]
        %v475 = vld [vmem:[%s292 + $0x170] sm:$0xff]
        %v476 = vld [vmem:[%s292 + $0x178] sm:$0xff]
        %v477 = vld [vmem:[%s292 + $0x180] sm:$0xff]
        %v478 = vld [vmem:[%s292 + $0x188] sm:$0xff]
        %v479 = vld [vmem:[%s292 + $0x190] sm:$0xff]
        %v480 = vld [vmem:[%s292 + $0x198] sm:$0xff]
        %v481 = vld [vmem:[%s292 + $0x1a0] sm:$0xff]
        %v482 = vld [vmem:[%s292 + $0x1a8] sm:$0xff]
        %v483 = vld [vmem:[%s292 + $0x1b0] sm:$0xff]
        %v484 = vld [vmem:[%s292 + $0x1b8] sm:$0xff]
        %v485 = vld [vmem:[%s292 + $0x1c0] sm:$0xff]
        %v486 = vld [vmem:[%s292 + $0x1c8] sm:$0xff]
        %v487 = vld [vmem:[%s292 + $0x1d0] sm:$0xff]
        %v488 = vld [vmem:[%s292 + $0x1d8] sm:$0xff]
        %v489 = vld [vmem:[%s292 + $0x1e0] sm:$0xff]
        %v490 = vld [vmem:[%s292 + $0x1e8] sm:$0xff]
        %v491 = vld [vmem:[%s292 + $0x1f0] sm:$0xff]
        %v492 = vld [vmem:[%s292 + $0x1f8] sm:$0xff]
        %v493 = vld [vmem:[%s0] sm:$0xf]
        %v494 = vld [vmem:[%s0 + $0x4] sm:$0xf]
        %v495 = vld [vmem:[%s0 + $0x8] sm:$0xf]
        %v496 = vld [vmem:[%s0 + $0xc] sm:$0xf]
        %v497 = vld [vmem:[%s0 + $0x10] sm:$0xf]
        %v498 = vld [vmem:[%s0 + $0x14] sm:$0xf]
        %v499 = vld [vmem:[%s0 + $0x18] sm:$0xf]
        %v500 = vld [vmem:[%s0 + $0x1c] sm:$0xf]
        %v501 = vld [vmem:[%s0 + $0x20] sm:$0xf]
        %v502 = vld [vmem:[%s0 + $0x24] sm:$0xf]
        %v503 = vld [vmem:[%s0 + $0x28] sm:$0xf]
        %v504 = vld [vmem:[%s0 + $0x2c] sm:$0xf]
        %v505 = vld [vmem:[%s0 + $0x30] sm:$0xf]
        %v506 = vld [vmem:[%s0 + $0x34] sm:$0xf]
        %v507 = vld [vmem:[%s0 + $0x38] sm:$0xf]
        %v508 = vld [vmem:[%s0 + $0x3c] sm:$0xf]
        %v509 = vld [vmem:[%s0 + $0x40] sm:$0xf]
        %v510 = vld [vmem:[%s0 + $0x44] sm:$0xf]
        %v511 = vld [vmem:[%s0 + $0x48] sm:$0xf]
        %v512 = vld [vmem:[%s0 + $0x4c] sm:$0xf]
        %v513 = vld [vmem:[%s0 + $0x50] sm:$0xf]
        %v514 = vld [vmem:[%s0 + $0x54] sm:$0xf]
        %v515 = vld [vmem:[%s0 + $0x58] sm:$0xf]
        %v516 = vld [vmem:[%s0 + $0x5c] sm:$0xf]
        %v517 = vld [vmem:[%s0 + $0x60] sm:$0xf]
        %v518 = vld [vmem:[%s0 + $0x64] sm:$0xf]
        %v519 = vld [vmem:[%s0 + $0x68] sm:$0xf]
        %v520 = vld [vmem:[%s0 + $0x6c] sm:$0xf]
        %v521 = vld [vmem:[%s0 + $0x70] sm:$0xf]
        %v522 = vld [vmem:[%s0 + $0x74] sm:$0xf]
        %v523 = vld [vmem:[%s0 + $0x78] sm:$0xf]
        %v524 = vld [vmem:[%s0 + $0x7c] sm:$0xf]
        %v525 = vld [vmem:[%s0 + $0x80] sm:$0xf]
        %v526 = vld [vmem:[%s0 + $0x84] sm:$0xf]
        %v527 = vld [vmem:[%s0 + $0x88] sm:$0xf]
        %v528 = vld [vmem:[%s0 + $0x8c] sm:$0xf]
        %v529 = vld [vmem:[%s0 + $0x90] sm:$0xf]
        %v530 = vld [vmem:[%s0 + $0x94] sm:$0xf]
        %v531 = vld [vmem:[%s0 + $0x98] sm:$0xf]
        %v532 = vld [vmem:[%s0 + $0x9c] sm:$0xf]
        %v533 = vld [vmem:[%s0 + $0xa0] sm:$0xf]
        %v534 = vld [vmem:[%s0 + $0xa4] sm:$0xf]
        %v535 = vld [vmem:[%s0 + $0xa8] sm:$0xf]
        %v536 = vld [vmem:[%s0 + $0xac] sm:$0xf]
        %v537 = vld [vmem:[%s0 + $0xb0] sm:$0xf]
        %v538 = vld [vmem:[%s0 + $0xb4] sm:$0xf]
        %v539 = vld [vmem:[%s0 + $0xb8] sm:$0xf]
        %v540 = vld [vmem:[%s0 + $0xbc] sm:$0xf]
        %v541 = vld [vmem:[%s0 + $0xc0] sm:$0xf]
        %v542 = vld [vmem:[%s0 + $0xc4] sm:$0xf]
        %v543 = vld [vmem:[%s0 + $0xc8] sm:$0xf]
        %v544 = vld [vmem:[%s0 + $0xcc] sm:$0xf]
        %v545 = vld [vmem:[%s0 + $0xd0] sm:$0xf]
        %v546 = vld [vmem:[%s0 + $0xd4] sm:$0xf]
        %v547 = vld [vmem:[%s0 + $0xd8] sm:$0xf]
        %v548 = vld [vmem:[%s0 + $0xdc] sm:$0xf]
        %v549 = vld [vmem:[%s0 + $0xe0] sm:$0xf]
        %v550 = vld [vmem:[%s0 + $0xe4] sm:$0xf]
        %v551 = vld [vmem:[%s0 + $0xe8] sm:$0xf]
        %v552 = vld [vmem:[%s0 + $0xec] sm:$0xf]
        %v553 = vld [vmem:[%s0 + $0xf0] sm:$0xf]
        %v554 = vld [vmem:[%s0 + $0xf4] sm:$0xf]
        %v555 = vld [vmem:[%s0 + $0xf8] sm:$0xf]
        %v556 = vld [vmem:[%s0 + $0xfc] sm:$0xf]
        %v621 = vunpack.c.l.b16 %v429
        %v622 = vunpack.c.h.b16 %v429
        %v623 = vunpack.c.l.b16 %v430
        %v624 = vunpack.c.h.b16 %v430
        %v625 = vunpack.c.l.b16 %v431
        %v626 = vunpack.c.h.b16 %v431
        %v627 = vunpack.c.l.b16 %v432
        %v628 = vunpack.c.h.b16 %v432
        %v629 = vunpack.c.l.b16 %v433
        %v630 = vunpack.c.h.b16 %v433
        %v631 = vunpack.c.l.b16 %v434
        %v632 = vunpack.c.h.b16 %v434
        %v633 = vunpack.c.l.b16 %v435
        %v634 = vunpack.c.h.b16 %v435
        %v635 = vunpack.c.l.b16 %v436
        %v636 = vunpack.c.h.b16 %v436
        %v637 = vunpack.c.l.b16 %v437
        %v638 = vunpack.c.h.b16 %v437
        %v639 = vunpack.c.l.b16 %v438
        %v640 = vunpack.c.h.b16 %v438
        %v641 = vunpack.c.l.b16 %v439
        %v642 = vunpack.c.h.b16 %v439
        %v643 = vunpack.c.l.b16 %v440
        %v644 = vunpack.c.h.b16 %v440
        %v645 = vunpack.c.l.b16 %v441
        %v646 = vunpack.c.h.b16 %v441
        %v647 = vunpack.c.l.b16 %v442
        %v648 = vunpack.c.h.b16 %v442
        %v649 = vunpack.c.l.b16 %v443
        %v650 = vunpack.c.h.b16 %v443
        %v651 = vunpack.c.l.b16 %v444
        %v652 = vunpack.c.h.b16 %v444
        %v653 = vunpack.c.l.b16 %v445
        %v654 = vunpack.c.h.b16 %v445
        %v655 = vunpack.c.l.b16 %v446
        %v656 = vunpack.c.h.b16 %v446
        %v657 = vunpack.c.l.b16 %v447
        %v658 = vunpack.c.h.b16 %v447
        %v659 = vunpack.c.l.b16 %v448
        %v660 = vunpack.c.h.b16 %v448
        %v661 = vunpack.c.l.b16 %v449
        %v662 = vunpack.c.h.b16 %v449
        %v663 = vunpack.c.l.b16 %v450
        %v664 = vunpack.c.h.b16 %v450
        %v665 = vunpack.c.l.b16 %v451
        %v666 = vunpack.c.h.b16 %v451
        %v667 = vunpack.c.l.b16 %v452
        %v668 = vunpack.c.h.b16 %v452
        %v669 = vunpack.c.l.b16 %v453
        %v670 = vunpack.c.h.b16 %v453
        %v671 = vunpack.c.l.b16 %v454
        %v672 = vunpack.c.h.b16 %v454
        %v673 = vunpack.c.l.b16 %v455
        %v674 = vunpack.c.h.b16 %v455
        %v675 = vunpack.c.l.b16 %v456
        %v676 = vunpack.c.h.b16 %v456
        %v677 = vunpack.c.l.b16 %v457
        %v678 = vunpack.c.h.b16 %v457
        %v679 = vunpack.c.l.b16 %v458
        %v680 = vunpack.c.h.b16 %v458
        %v681 = vunpack.c.l.b16 %v459
        %v682 = vunpack.c.h.b16 %v459
        %v683 = vunpack.c.l.b16 %v460
        %v684 = vunpack.c.h.b16 %v460
        %v685 = vunpack.c.l.b16 %v461
        %v686 = vunpack.c.h.b16 %v461
        %v687 = vunpack.c.l.b16 %v462
        %v688 = vunpack.c.h.b16 %v462
        %v689 = vunpack.c.l.b16 %v463
        %v690 = vunpack.c.h.b16 %v463
        %v691 = vunpack.c.l.b16 %v464
        %v692 = vunpack.c.h.b16 %v464
        %v693 = vunpack.c.l.b16 %v465
        %v694 = vunpack.c.h.b16 %v465
        %v695 = vunpack.c.l.b16 %v466
        %v696 = vunpack.c.h.b16 %v466
        %v697 = vunpack.c.l.b16 %v467
        %v698 = vunpack.c.h.b16 %v467
        %v699 = vunpack.c.l.b16 %v468
        %v700 = vunpack.c.h.b16 %v468
        %v701 = vunpack.c.l.b16 %v469
        %v702 = vunpack.c.h.b16 %v469
        %v703 = vunpack.c.l.b16 %v470
        %v704 = vunpack.c.h.b16 %v470
        %v705 = vunpack.c.l.b16 %v471
        %v706 = vunpack.c.h.b16 %v471
        %v707 = vunpack.c.l.b16 %v472
        %v708 = vunpack.c.h.b16 %v472
        %v709 = vunpack.c.l.b16 %v473
        %v710 = vunpack.c.h.b16 %v473
        %v711 = vunpack.c.l.b16 %v474
        %v712 = vunpack.c.h.b16 %v474
        %v713 = vunpack.c.l.b16 %v475
        %v714 = vunpack.c.h.b16 %v475
        %v715 = vunpack.c.l.b16 %v476
        %v716 = vunpack.c.h.b16 %v476
        %v717 = vunpack.c.l.b16 %v477
        %v718 = vunpack.c.h.b16 %v477
        %v719 = vunpack.c.l.b16 %v478
        %v720 = vunpack.c.h.b16 %v478
        %v721 = vunpack.c.l.b16 %v479
        %v722 = vunpack.c.h.b16 %v479
        %v723 = vunpack.c.l.b16 %v480
        %v724 = vunpack.c.h.b16 %v480
        %v725 = vunpack.c.l.b16 %v481
        %v726 = vunpack.c.h.b16 %v481
        %v727 = vunpack.c.l.b16 %v482
        %v728 = vunpack.c.h.b16 %v482
        %v729 = vunpack.c.l.b16 %v483
        %v730 = vunpack.c.h.b16 %v483
        %v731 = vunpack.c.l.b16 %v484
        %v732 = vunpack.c.h.b16 %v484
        %v733 = vunpack.c.l.b16 %v485
        %v734 = vunpack.c.h.b16 %v485
        %v735 = vunpack.c.l.b16 %v486
        %v736 = vunpack.c.h.b16 %v486
        %v737 = vunpack.c.l.b16 %v487
        %v738 = vunpack.c.h.b16 %v487
        %v739 = vunpack.c.l.b16 %v488
        %v740 = vunpack.c.h.b16 %v488
        %v741 = vunpack.c.l.b16 %v489
        %v742 = vunpack.c.h.b16 %v489
        %v743 = vunpack.c.l.b16 %v490
        %v744 = vunpack.c.h.b16 %v490
        %v745 = vunpack.c.l.b16 %v491
        %v746 = vunpack.c.h.b16 %v491
        %v747 = vunpack.c.l.b16 %v492
        %v748 = vunpack.c.h.b16 %v492
        %v749 = vpack.c.b16 %v625, %v621
        %v750 = vpack.c.b16 %v626, %v622
        %v751 = vpack.c.b16 %v627, %v623
        %v752 = vpack.c.b16 %v628, %v624
        %v753 = vpack.c.b16 %v633, %v629
        %v754 = vpack.c.b16 %v634, %v630
        %v755 = vpack.c.b16 %v635, %v631
        %v756 = vpack.c.b16 %v636, %v632
        %v757 = vpack.c.b16 %v641, %v637
        %v758 = vpack.c.b16 %v642, %v638
        %v759 = vpack.c.b16 %v643, %v639
        %v760 = vpack.c.b16 %v644, %v640
        %v761 = vpack.c.b16 %v649, %v645
        %v762 = vpack.c.b16 %v650, %v646
        %v763 = vpack.c.b16 %v651, %v647
        %v764 = vpack.c.b16 %v652, %v648
        %v765 = vpack.c.b16 %v657, %v653
        %v766 = vpack.c.b16 %v658, %v654
        %v767 = vpack.c.b16 %v659, %v655
        %v768 = vpack.c.b16 %v660, %v656
        %v769 = vpack.c.b16 %v665, %v661
        %v770 = vpack.c.b16 %v666, %v662
        %v771 = vpack.c.b16 %v667, %v663
        %v772 = vpack.c.b16 %v668, %v664
        %v773 = vpack.c.b16 %v673, %v669
        %v774 = vpack.c.b16 %v674, %v670
        %v775 = vpack.c.b16 %v675, %v671
        %v776 = vpack.c.b16 %v676, %v672
        %v777 = vpack.c.b16 %v681, %v677
        %v778 = vpack.c.b16 %v682, %v678
        %v779 = vpack.c.b16 %v683, %v679
        %v780 = vpack.c.b16 %v684, %v680
        %v781 = vpack.c.b16 %v689, %v685
        %v782 = vpack.c.b16 %v690, %v686
        %v783 = vpack.c.b16 %v691, %v687
        %v784 = vpack.c.b16 %v692, %v688
        %v785 = vpack.c.b16 %v697, %v693
        %v786 = vpack.c.b16 %v698, %v694
        %v787 = vpack.c.b16 %v699, %v695
        %v788 = vpack.c.b16 %v700, %v696
        %v789 = vpack.c.b16 %v705, %v701
        %v790 = vpack.c.b16 %v706, %v702
        %v791 = vpack.c.b16 %v707, %v703
        %v792 = vpack.c.b16 %v708, %v704
        %v793 = vpack.c.b16 %v713, %v709
        %v794 = vpack.c.b16 %v714, %v710
        %v795 = vpack.c.b16 %v715, %v711
        %v796 = vpack.c.b16 %v716, %v712
        %v797 = vpack.c.b16 %v721, %v717
        %v798 = vpack.c.b16 %v722, %v718
        %v799 = vpack.c.b16 %v723, %v719
        %v800 = vpack.c.b16 %v724, %v720
        %v801 = vpack.c.b16 %v729, %v725
        %v802 = vpack.c.b16 %v730, %v726
        %v803 = vpack.c.b16 %v731, %v727
        %v804 = vpack.c.b16 %v732, %v728
        %v805 = vpack.c.b16 %v737, %v733
        %v806 = vpack.c.b16 %v738, %v734
        %v807 = vpack.c.b16 %v739, %v735
        %v808 = vpack.c.b16 %v740, %v736
        %v809 = vpack.c.b16 %v745, %v741
        %v810 = vpack.c.b16 %v746, %v742
        %v811 = vpack.c.b16 %v747, %v743
        %v812 = vpack.c.b16 %v748, %v744
        %v941 = vunpack.c.l.b16 %v493
        %v942 = vunpack.c.l.b16 %v494
        %v943 = vunpack.c.l.b16 %v495
        %v944 = vunpack.c.l.b16 %v496
        %v945 = vunpack.c.l.b16 %v497
        %v946 = vunpack.c.l.b16 %v498
        %v947 = vunpack.c.l.b16 %v499
        %v948 = vunpack.c.l.b16 %v500
        %v949 = vunpack.c.l.b16 %v501
        %v950 = vunpack.c.l.b16 %v502
        %v951 = vunpack.c.l.b16 %v503
        %v952 = vunpack.c.l.b16 %v504
        %v953 = vunpack.c.l.b16 %v505
        %v954 = vunpack.c.l.b16 %v506
        %v955 = vunpack.c.l.b16 %v507
        %v956 = vunpack.c.l.b16 %v508
        %v957 = vunpack.c.l.b16 %v509
        %v958 = vunpack.c.l.b16 %v510
        %v959 = vunpack.c.l.b16 %v511
        %v960 = vunpack.c.l.b16 %v512
        %v961 = vunpack.c.l.b16 %v513
        %v962 = vunpack.c.l.b16 %v514
        %v963 = vunpack.c.l.b16 %v515
        %v964 = vunpack.c.l.b16 %v516
        %v965 = vunpack.c.l.b16 %v517
        %v966 = vunpack.c.l.b16 %v518
        %v967 = vunpack.c.l.b16 %v519
        %v968 = vunpack.c.l.b16 %v520
        %v969 = vunpack.c.l.b16 %v521
        %v970 = vunpack.c.l.b16 %v522
        %v971 = vunpack.c.l.b16 %v523
        %v972 = vunpack.c.l.b16 %v524
        %v973 = vunpack.c.l.b16 %v525
        %v974 = vunpack.c.l.b16 %v526
        %v975 = vunpack.c.l.b16 %v527
        %v976 = vunpack.c.l.b16 %v528
        %v977 = vunpack.c.l.b16 %v529
        %v978 = vunpack.c.l.b16 %v530
        %v979 = vunpack.c.l.b16 %v531
        %v980 = vunpack.c.l.b16 %v532
        %v981 = vunpack.c.l.b16 %v533
        %v982 = vunpack.c.l.b16 %v534
        %v983 = vunpack.c.l.b16 %v535
        %v984 = vunpack.c.l.b16 %v536
        %v985 = vunpack.c.l.b16 %v537
        %v986 = vunpack.c.l.b16 %v538
        %v987 = vunpack.c.l.b16 %v539
        %v988 = vunpack.c.l.b16 %v540
        %v989 = vunpack.c.l.b16 %v541
        %v990 = vunpack.c.l.b16 %v542
        %v991 = vunpack.c.l.b16 %v543
        %v992 = vunpack.c.l.b16 %v544
        %v993 = vunpack.c.l.b16 %v545
        %v994 = vunpack.c.l.b16 %v546
        %v995 = vunpack.c.l.b16 %v547
        %v996 = vunpack.c.l.b16 %v548
        %v997 = vunpack.c.l.b16 %v549
        %v998 = vunpack.c.l.b16 %v550
        %v999 = vunpack.c.l.b16 %v551
        %v1000 = vunpack.c.l.b16 %v552
        %v1001 = vunpack.c.l.b16 %v553
        %v1002 = vunpack.c.l.b16 %v554
        %v1003 = vunpack.c.l.b16 %v555
        %v1004 = vunpack.c.l.b16 %v556
        %v1005 = vpack.c.b16 %v942, %v941
        %v1006 = vpack.c.b16 %v944, %v943
        %v1007 = vpack.c.b16 %v946, %v945
        %v1008 = vpack.c.b16 %v948, %v947
        %v1009 = vpack.c.b16 %v950, %v949
        %v1010 = vpack.c.b16 %v952, %v951
        %v1011 = vpack.c.b16 %v954, %v953
        %v1012 = vpack.c.b16 %v956, %v955
        %v1013 = vpack.c.b16 %v958, %v957
        %v1014 = vpack.c.b16 %v960, %v959
        %v1015 = vpack.c.b16 %v962, %v961
        %v1016 = vpack.c.b16 %v964, %v963
        %v1017 = vpack.c.b16 %v966, %v965
        %v1018 = vpack.c.b16 %v968, %v967
        %v1019 = vpack.c.b16 %v970, %v969
        %v1020 = vpack.c.b16 %v972, %v971
        %v1021 = vpack.c.b16 %v974, %v973
        %v1022 = vpack.c.b16 %v976, %v975
        %v1023 = vpack.c.b16 %v978, %v977
        %v1024 = vpack.c.b16 %v980, %v979
        %v1025 = vpack.c.b16 %v982, %v981
        %v1026 = vpack.c.b16 %v984, %v983
        %v1027 = vpack.c.b16 %v986, %v985
        %v1028 = vpack.c.b16 %v988, %v987
        %v1029 = vpack.c.b16 %v990, %v989
        %v1030 = vpack.c.b16 %v992, %v991
        %v1031 = vpack.c.b16 %v994, %v993
        %v1032 = vpack.c.b16 %v996, %v995
        %v1033 = vpack.c.b16 %v998, %v997
        %v1034 = vpack.c.b16 %v1000, %v999
        %v1035 = vpack.c.b16 %v1002, %v1001
        %v1036 = vpack.c.b16 %v1004, %v1003
        %1069 = vmatprep.subr.bf16.mxu0 0
        %1070 = vmatpush1.bf16.msra.mxu0 %v1012
        %1071 = vmatprep.subr.bf16.mxu0 0
        %1072 = vmatpush1.bf16.msra.mxu0 %v1011
        %1073 = vmatprep.subr.bf16.mxu0 0
        %1074 = vmatpush1.bf16.msra.mxu0 %v1010
        %1075 = vmatprep.subr.bf16.mxu0 0
        %1076 = vmatpush1.bf16.msra.mxu0 %v1009
        %1077 = vmatprep.subr.bf16.mxu0 0
        %1078 = vmatpush1.bf16.msra.mxu0 %v1008
        %1079 = vmatprep.subr.bf16.mxu0 0
        %1080 = vmatpush1.bf16.msra.mxu0 %v1007
        %1081 = vmatprep.subr.bf16.mxu0 0
        %1082 = vmatpush1.bf16.msra.mxu0 %v1006
        %1083 = vmatprep.subr.bf16.mxu0 0
        %1084 = vmatpush1.bf16.msra.mxu0 %v1005
        %1085 = vmatprep.subr.bf16.mxu0 0
        %1086 = vmatpush2.bf16.msra.mxu0 %v1020
        %1087 = vmatprep.subr.bf16.mxu0 0
        %1088 = vmatpush2.bf16.msra.mxu0 %v1019
        %1089 = vmatprep.subr.bf16.mxu0 0
        %1090 = vmatpush2.bf16.msra.mxu0 %v1018
        %1091 = vmatprep.subr.bf16.mxu0 0
        %1092 = vmatpush2.bf16.msra.mxu0 %v1017
        %1093 = vmatprep.subr.bf16.mxu0 0
        %1094 = vmatpush2.bf16.msra.mxu0 %v1016
        %1095 = vmatprep.subr.bf16.mxu0 0
        %1096 = vmatpush2.bf16.msra.mxu0 %v1015
        %1097 = vmatprep.subr.bf16.mxu0 0
        %1098 = vmatpush2.bf16.msra.mxu0 %v1014
        %1099 = vmatprep.subr.bf16.mxu0 0
        %1100 = vmatpush2.bf16.msra.mxu0 %v1013
        %1101 = vmatprep.mubr.bf16.mxu0 %v750
        %1102 = vmatmul.mubr.bf16.gmra.mxu0 %v749
        %v1103 = vpop.f32.mrf.mxu0
        %v1104 = vadd.f32 0.0, %v1103
        %v1105 = vpop.f32.mrf.mxu0
        %v1106 = vpop.f32.mrf.mxu0
        %v1107 = vadd.f32 0.0, %v1106
        %v1108 = vpop.f32.mrf.mxu0
        %1109 = vmatprep.mubr.bf16.mxu0 %v754
        %1110 = vmatmul.mubr.bf16.gmra.mxu0 %v753
        %v1111 = vpop.f32.mrf.mxu0
        %v1112 = vadd.f32 0.0, %v1111
        %v1113 = vpop.f32.mrf.mxu0
        %v1114 = vpop.f32.mrf.mxu0
        %v1115 = vadd.f32 0.0, %v1114
        %v1116 = vpop.f32.mrf.mxu0
        %1117 = vmatprep.mubr.bf16.mxu0 %v758
        %1118 = vmatmul.mubr.bf16.gmra.mxu0 %v757
        %v1119 = vpop.f32.mrf.mxu0
        %v1120 = vadd.f32 0.0, %v1119
        %v1121 = vpop.f32.mrf.mxu0
        %v1122 = vpop.f32.mrf.mxu0
        %v1123 = vadd.f32 0.0, %v1122
        %v1124 = vpop.f32.mrf.mxu0
        %1125 = vmatprep.mubr.bf16.mxu0 %v762
        %1126 = vmatmul.mubr.bf16.gmra.mxu0 %v761
        %v1127 = vpop.f32.mrf.mxu0
        %v1128 = vadd.f32 0.0, %v1127
        %v1129 = vpop.f32.mrf.mxu0
        %v1130 = vpop.f32.mrf.mxu0
        %v1131 = vadd.f32 0.0, %v1130
        %v1132 = vpop.f32.mrf.mxu0
        %1133 = vmatprep.mubr.bf16.mxu0 %v766
        %1134 = vmatmul.mubr.bf16.gmra.mxu0 %v765
        %v1135 = vpop.f32.mrf.mxu0
        %v1136 = vadd.f32 0.0, %v1135
        %v1137 = vpop.f32.mrf.mxu0
        %v1138 = vpop.f32.mrf.mxu0
        %v1139 = vadd.f32 0.0, %v1138
        %v1140 = vpop.f32.mrf.mxu0
        %1141 = vmatprep.mubr.bf16.mxu0 %v770
        %1142 = vmatmul.mubr.bf16.gmra.mxu0 %v769
        %v1143 = vpop.f32.mrf.mxu0
        %v1144 = vadd.f32 0.0, %v1143
        %v1145 = vpop.f32.mrf.mxu0
        %v1146 = vpop.f32.mrf.mxu0
        %v1147 = vadd.f32 0.0, %v1146
        %v1148 = vpop.f32.mrf.mxu0
        %1149 = vmatprep.mubr.bf16.mxu0 %v774
        %1150 = vmatmul.mubr.bf16.gmra.mxu0 %v773
        %v1151 = vpop.f32.mrf.mxu0
        %v1152 = vadd.f32 0.0, %v1151
        %v1153 = vpop.f32.mrf.mxu0
        %v1154 = vpop.f32.mrf.mxu0
        %v1155 = vadd.f32 0.0, %v1154
        %v1156 = vpop.f32.mrf.mxu0
        %1157 = vmatprep.mubr.bf16.mxu0 %v778
        %1158 = vmatmul.mubr.bf16.gmra.mxu0 %v777
        %v1159 = vpop.f32.mrf.mxu0
        %v1160 = vadd.f32 0.0, %v1159
        %v1161 = vpop.f32.mrf.mxu0
        %v1162 = vpop.f32.mrf.mxu0
        %v1163 = vadd.f32 0.0, %v1162
        %v1164 = vpop.f32.mrf.mxu0
        %1165 = vmatprep.mubr.bf16.mxu0 %v782
        %1166 = vmatmul.mubr.bf16.gmra.mxu0 %v781
        %v1167 = vpop.f32.mrf.mxu0
        %v1168 = vadd.f32 0.0, %v1167
        %v1169 = vpop.f32.mrf.mxu0
        %v1170 = vpop.f32.mrf.mxu0
        %v1171 = vadd.f32 0.0, %v1170
        %v1172 = vpop.f32.mrf.mxu0
        %1173 = vmatprep.mubr.bf16.mxu0 %v786
        %1174 = vmatmul.mubr.bf16.gmra.mxu0 %v785
        %v1175 = vpop.f32.mrf.mxu0
        %v1176 = vadd.f32 0.0, %v1175
        %v1177 = vpop.f32.mrf.mxu0
        %v1178 = vpop.f32.mrf.mxu0
        %v1179 = vadd.f32 0.0, %v1178
        %v1180 = vpop.f32.mrf.mxu0
        %1181 = vmatprep.mubr.bf16.mxu0 %v790
        %1182 = vmatmul.mubr.bf16.gmra.mxu0 %v789
        %v1183 = vpop.f32.mrf.mxu0
        %v1184 = vadd.f32 0.0, %v1183
        %v1185 = vpop.f32.mrf.mxu0
        %v1186 = vpop.f32.mrf.mxu0
        %v1187 = vadd.f32 0.0, %v1186
        %v1188 = vpop.f32.mrf.mxu0
        %1189 = vmatprep.mubr.bf16.mxu0 %v794
        %1190 = vmatmul.mubr.bf16.gmra.mxu0 %v793
        %v1191 = vpop.f32.mrf.mxu0
        %v1192 = vadd.f32 0.0, %v1191
        %v1193 = vpop.f32.mrf.mxu0
        %v1194 = vpop.f32.mrf.mxu0
        %v1195 = vadd.f32 0.0, %v1194
        %v1196 = vpop.f32.mrf.mxu0
        %1197 = vmatprep.mubr.bf16.mxu0 %v798
        %1198 = vmatmul.mubr.bf16.gmra.mxu0 %v797
        %v1199 = vpop.f32.mrf.mxu0
        %v1200 = vadd.f32 0.0, %v1199
        %v1201 = vpop.f32.mrf.mxu0
        %v1202 = vpop.f32.mrf.mxu0
        %v1203 = vadd.f32 0.0, %v1202
        %v1204 = vpop.f32.mrf.mxu0
        %1205 = vmatprep.mubr.bf16.mxu0 %v802
        %1206 = vmatmul.mubr.bf16.gmra.mxu0 %v801
        %v1207 = vpop.f32.mrf.mxu0
        %v1208 = vadd.f32 0.0, %v1207
        %v1209 = vpop.f32.mrf.mxu0
        %v1210 = vpop.f32.mrf.mxu0
        %v1211 = vadd.f32 0.0, %v1210
        %v1212 = vpop.f32.mrf.mxu0
        %1213 = vmatprep.mubr.bf16.mxu0 %v806
        %1214 = vmatmul.mubr.bf16.gmra.mxu0 %v805
        %v1215 = vpop.f32.mrf.mxu0
        %v1216 = vadd.f32 0.0, %v1215
        %v1217 = vpop.f32.mrf.mxu0
        %v1218 = vpop.f32.mrf.mxu0
        %v1219 = vadd.f32 0.0, %v1218
        %v1220 = vpop.f32.mrf.mxu0
        %1221 = vmatprep.mubr.bf16.mxu0 %v810
        %1222 = vmatmul.mubr.bf16.gmra.mxu0 %v809
        %v1223 = vpop.f32.mrf.mxu0
        %v1224 = vadd.f32 0.0, %v1223
        %v1225 = vpop.f32.mrf.mxu0
        %v1226 = vpop.f32.mrf.mxu0
        %v1227 = vadd.f32 0.0, %v1226
        %v1228 = vpop.f32.mrf.mxu0
        %1229 = vdwg.mxu0
        %1230 = vmatprep.subr.bf16.mxu0 0
        %1231 = vmatpush1.bf16.msra.mxu0 %v1028
        %1232 = vmatprep.subr.bf16.mxu0 0
        %1233 = vmatpush1.bf16.msra.mxu0 %v1027
        %1234 = vmatprep.subr.bf16.mxu0 0
        %1235 = vmatpush1.bf16.msra.mxu0 %v1026
        %1236 = vmatprep.subr.bf16.mxu0 0
        %1237 = vmatpush1.bf16.msra.mxu0 %v1025
        %1238 = vmatprep.subr.bf16.mxu0 0
        %1239 = vmatpush1.bf16.msra.mxu0 %v1024
        %1240 = vmatprep.subr.bf16.mxu0 0
        %1241 = vmatpush1.bf16.msra.mxu0 %v1023
        %1242 = vmatprep.subr.bf16.mxu0 0
        %1243 = vmatpush1.bf16.msra.mxu0 %v1022
        %1244 = vmatprep.subr.bf16.mxu0 0
        %1245 = vmatpush1.bf16.msra.mxu0 %v1021
        %1246 = vmatprep.subr.bf16.mxu0 0
        %1247 = vmatpush2.bf16.msra.mxu0 %v1036
        %1248 = vmatprep.subr.bf16.mxu0 0
        %1249 = vmatpush2.bf16.msra.mxu0 %v1035
        %1250 = vmatprep.subr.bf16.mxu0 0
        %1251 = vmatpush2.bf16.msra.mxu0 %v1034
        %1252 = vmatprep.subr.bf16.mxu0 0
        %1253 = vmatpush2.bf16.msra.mxu0 %v1033
        %1254 = vmatprep.subr.bf16.mxu0 0
        %1255 = vmatpush2.bf16.msra.mxu0 %v1032
        %1256 = vmatprep.subr.bf16.mxu0 0
        %1257 = vmatpush2.bf16.msra.mxu0 %v1031
        %1258 = vmatprep.subr.bf16.mxu0 0
        %1259 = vmatpush2.bf16.msra.mxu0 %v1030
        %1260 = vmatprep.subr.bf16.mxu0 0
        %1261 = vmatpush2.bf16.msra.mxu0 %v1029
        %1262 = vmatprep.mubr.bf16.mxu0 %v752
        %1263 = vmatmul.mubr.bf16.gmra.mxu0 %v751
        %v1264 = vpop.f32.mrf.mxu0
        %v1265 = vadd.f32 %v1104, %v1264
        %v1266 = vpop.f32.mrf.mxu0
        %v1267 = vpop.f32.mrf.mxu0
        %v1268 = vadd.f32 %v1107, %v1267
        %v1269 = vpop.f32.mrf.mxu0
        %1270 = vmatprep.mubr.bf16.mxu0 %v756
        %1271 = vmatmul.mubr.bf16.gmra.mxu0 %v755
        %v1272 = vpop.f32.mrf.mxu0
        %v1273 = vadd.f32 %v1112, %v1272
        %v1274 = vpop.f32.mrf.mxu0
        %v1275 = vpop.f32.mrf.mxu0
        %v1276 = vadd.f32 %v1115, %v1275
        %v1277 = vpop.f32.mrf.mxu0
        %1278 = vmatprep.mubr.bf16.mxu0 %v760
        %1279 = vmatmul.mubr.bf16.gmra.mxu0 %v759
        %v1280 = vpop.f32.mrf.mxu0
        %v1281 = vadd.f32 %v1120, %v1280
        %v1282 = vpop.f32.mrf.mxu0
        %v1283 = vpop.f32.mrf.mxu0
        %v1284 = vadd.f32 %v1123, %v1283
        %v1285 = vpop.f32.mrf.mxu0
        %1286 = vmatprep.mubr.bf16.mxu0 %v764
        %1287 = vmatmul.mubr.bf16.gmra.mxu0 %v763
        %v1288 = vpop.f32.mrf.mxu0
        %v1289 = vadd.f32 %v1128, %v1288
        %v1290 = vpop.f32.mrf.mxu0
        %v1291 = vpop.f32.mrf.mxu0
        %v1292 = vadd.f32 %v1131, %v1291
        %v1293 = vpop.f32.mrf.mxu0
        %1294 = vmatprep.mubr.bf16.mxu0 %v768
        %1295 = vmatmul.mubr.bf16.gmra.mxu0 %v767
        %v1296 = vpop.f32.mrf.mxu0
        %v1297 = vadd.f32 %v1136, %v1296
        %v1298 = vpop.f32.mrf.mxu0
        %v1299 = vpop.f32.mrf.mxu0
        %v1300 = vadd.f32 %v1139, %v1299
        %v1301 = vpop.f32.mrf.mxu0
        %1302 = vmatprep.mubr.bf16.mxu0 %v772
        %1303 = vmatmul.mubr.bf16.gmra.mxu0 %v771
        %v1304 = vpop.f32.mrf.mxu0
        %v1305 = vadd.f32 %v1144, %v1304
        %v1306 = vpop.f32.mrf.mxu0
        %v1307 = vpop.f32.mrf.mxu0
        %v1308 = vadd.f32 %v1147, %v1307
        %v1309 = vpop.f32.mrf.mxu0
        %1310 = vmatprep.mubr.bf16.mxu0 %v776
        %1311 = vmatmul.mubr.bf16.gmra.mxu0 %v775
        %v1312 = vpop.f32.mrf.mxu0
        %v1313 = vadd.f32 %v1152, %v1312
        %v1314 = vpop.f32.mrf.mxu0
        %v1315 = vpop.f32.mrf.mxu0
        %v1316 = vadd.f32 %v1155, %v1315
        %v1317 = vpop.f32.mrf.mxu0
        %1318 = vmatprep.mubr.bf16.mxu0 %v780
        %1319 = vmatmul.mubr.bf16.gmra.mxu0 %v779
        %v1320 = vpop.f32.mrf.mxu0
        %v1321 = vadd.f32 %v1160, %v1320
        %v1322 = vpop.f32.mrf.mxu0
        %v1323 = vpop.f32.mrf.mxu0
        %v1324 = vadd.f32 %v1163, %v1323
        %v1325 = vpop.f32.mrf.mxu0
        %1326 = vmatprep.mubr.bf16.mxu0 %v784
        %1327 = vmatmul.mubr.bf16.gmra.mxu0 %v783
        %v1328 = vpop.f32.mrf.mxu0
        %v1329 = vadd.f32 %v1168, %v1328
        %v1330 = vpop.f32.mrf.mxu0
        %v1331 = vpop.f32.mrf.mxu0
        %v1332 = vadd.f32 %v1171, %v1331
        %v1333 = vpop.f32.mrf.mxu0
        %1334 = vmatprep.mubr.bf16.mxu0 %v788
        %1335 = vmatmul.mubr.bf16.gmra.mxu0 %v787
        %v1336 = vpop.f32.mrf.mxu0
        %v1337 = vadd.f32 %v1176, %v1336
        %v1338 = vpop.f32.mrf.mxu0
        %v1339 = vpop.f32.mrf.mxu0
        %v1340 = vadd.f32 %v1179, %v1339
        %v1341 = vpop.f32.mrf.mxu0
        %1342 = vmatprep.mubr.bf16.mxu0 %v792
        %1343 = vmatmul.mubr.bf16.gmra.mxu0 %v791
        %v1344 = vpop.f32.mrf.mxu0
        %v1345 = vadd.f32 %v1184, %v1344
        %v1346 = vpop.f32.mrf.mxu0
        %v1347 = vpop.f32.mrf.mxu0
        %v1348 = vadd.f32 %v1187, %v1347
        %v1349 = vpop.f32.mrf.mxu0
        %1350 = vmatprep.mubr.bf16.mxu0 %v796
        %1351 = vmatmul.mubr.bf16.gmra.mxu0 %v795
        %v1352 = vpop.f32.mrf.mxu0
        %v1353 = vadd.f32 %v1192, %v1352
        %v1354 = vpop.f32.mrf.mxu0
        %v1355 = vpop.f32.mrf.mxu0
        %v1356 = vadd.f32 %v1195, %v1355
        %v1357 = vpop.f32.mrf.mxu0
        %1358 = vmatprep.mubr.bf16.mxu0 %v800
        %1359 = vmatmul.mubr.bf16.gmra.mxu0 %v799
        %v1360 = vpop.f32.mrf.mxu0
        %v1361 = vadd.f32 %v1200, %v1360
        %v1362 = vpop.f32.mrf.mxu0
        %v1363 = vpop.f32.mrf.mxu0
        %v1364 = vadd.f32 %v1203, %v1363
        %v1365 = vpop.f32.mrf.mxu0
        %1366 = vmatprep.mubr.bf16.mxu0 %v804
        %1367 = vmatmul.mubr.bf16.gmra.mxu0 %v803
        %v1368 = vpop.f32.mrf.mxu0
        %v1369 = vadd.f32 %v1208, %v1368
        %v1370 = vpop.f32.mrf.mxu0
        %v1371 = vpop.f32.mrf.mxu0
        %v1372 = vadd.f32 %v1211, %v1371
        %v1373 = vpop.f32.mrf.mxu0
        %1374 = vmatprep.mubr.bf16.mxu0 %v808
        %1375 = vmatmul.mubr.bf16.gmra.mxu0 %v807
        %v1376 = vpop.f32.mrf.mxu0
        %v1377 = vadd.f32 %v1216, %v1376
        %v1378 = vpop.f32.mrf.mxu0
        %v1379 = vpop.f32.mrf.mxu0
        %v1380 = vadd.f32 %v1219, %v1379
        %v1381 = vpop.f32.mrf.mxu0
        %1382 = vmatprep.mubr.bf16.mxu0 %v812
        %1383 = vmatmul.mubr.bf16.gmra.mxu0 %v811
        %v1384 = vpop.f32.mrf.mxu0
        %v1385 = vadd.f32 %v1224, %v1384
        %v1386 = vpop.f32.mrf.mxu0
        %v1387 = vpop.f32.mrf.mxu0
        %v1388 = vadd.f32 %v1227, %v1387
        %v1389 = vpop.f32.mrf.mxu0
        %1390 = vdwg.mxu0
        %v1391 = vadd.f32 %v397, %v1265
        %v1392 = vadd.f32 %v398, %v1268
        %v1393 = vadd.f32 %v399, %v1273
        %v1394 = vadd.f32 %v400, %v1276
        %v1395 = vadd.f32 %v401, %v1281
        %v1396 = vadd.f32 %v402, %v1284
        %v1397 = vadd.f32 %v403, %v1289
        %v1398 = vadd.f32 %v404, %v1292
        %v1399 = vadd.f32 %v405, %v1297
        %v1400 = vadd.f32 %v406, %v1300
        %v1401 = vadd.f32 %v407, %v1305
        %v1402 = vadd.f32 %v408, %v1308
        %v1403 = vadd.f32 %v409, %v1313
        %v1404 = vadd.f32 %v410, %v1316
        %v1405 = vadd.f32 %v411, %v1321
        %v1406 = vadd.f32 %v412, %v1324
        %v1407 = vadd.f32 %v413, %v1329
        %v1408 = vadd.f32 %v414, %v1332
        %v1409 = vadd.f32 %v415, %v1337
        %v1410 = vadd.f32 %v416, %v1340
        %v1411 = vadd.f32 %v417, %v1345
        %v1412 = vadd.f32 %v418, %v1348
        %v1413 = vadd.f32 %v419, %v1353
        %v1414 = vadd.f32 %v420, %v1356
        %v1415 = vadd.f32 %v421, %v1361
        %v1416 = vadd.f32 %v422, %v1364
        %v1417 = vadd.f32 %v423, %v1369
        %v1418 = vadd.f32 %v424, %v1372
        %v1419 = vadd.f32 %v425, %v1377
        %v1420 = vadd.f32 %v426, %v1380
        %v1421 = vadd.f32 %v427, %v1385
        %v1422 = vadd.f32 %v428, %v1388
        %v1423 = vpack.c.bf16 %v1392, %v1391
        %v1424 = vpack.c.bf16 %v1394, %v1393
        %v1425 = vpack.c.bf16 %v1396, %v1395
        %v1426 = vpack.c.bf16 %v1398, %v1397
        %v1427 = vpack.c.bf16 %v1400, %v1399
        %v1428 = vpack.c.bf16 %v1402, %v1401
        %v1429 = vpack.c.bf16 %v1404, %v1403
        %v1430 = vpack.c.bf16 %v1406, %v1405
        %v1431 = vpack.c.bf16 %v1408, %v1407
        %v1432 = vpack.c.bf16 %v1410, %v1409
        %v1433 = vpack.c.bf16 %v1412, %v1411
        %v1434 = vpack.c.bf16 %v1414, %v1413
        %v1435 = vpack.c.bf16 %v1416, %v1415
        %v1436 = vpack.c.bf16 %v1418, %v1417
        %v1437 = vpack.c.bf16 %v1420, %v1419
        %v1438 = vpack.c.bf16 %v1422, %v1421
        %v1439 = vld [vmem:[%s2] sm:$0xff]
        %v1440 = vld [vmem:[%s2 + $0x8] sm:$0xff]
        %v1441 = vld [vmem:[%s3] sm:$0x3]
        %v1443 = vlaneseq
        %v1444 = vshrl.u32 %v1443, 7
        %v1445 = vsub.s32 0, %v1444
        %v1446 = vrot.slane %v1441, %v1445
        %v1447 = vlaneseq
        %v1448 = vshrl.u32 %v1447, 7
        %v1449 = vsub.s32 1, %v1448
        %v1450 = vrot.slane %v1441, %v1449
        %v1455 = vunpack.c.l.b16 %v1439
        %v1456 = vunpack.c.h.b16 %v1439
        %v1457 = vunpack.c.l.b16 %v1440
        %v1458 = vunpack.c.h.b16 %v1440
        %v1459 = vpack.c.b16 %v1457, %v1455
        %v1460 = vpack.c.b16 %v1458, %v1456
        %vm1463 = vcmask 130048
        %v1465 = vsel %vm1463, %v1423, 0
        %v1468 = vsel %vm1463, %v1424, 0
        %v1471 = vsel %vm1463, %v1425, 0
        %v1474 = vsel %vm1463, %v1426, 0
        %v1477 = vsel %vm1463, %v1427, 0
        %v1480 = vsel %vm1463, %v1428, 0
        %v1483 = vsel %vm1463, %v1429, 0
        %v1486 = vsel %vm1463, %v1430, 0
        %v1489 = vsel %vm1463, %v1431, 0
        %v1492 = vsel %vm1463, %v1432, 0
        %v1495 = vsel %vm1463, %v1433, 0
        %v1498 = vsel %vm1463, %v1434, 0
        %v1501 = vsel %vm1463, %v1435, 0
        %v1504 = vsel %vm1463, %v1436, 0
        %v1507 = vsel %vm1463, %v1437, 0
        %v1510 = vsel %vm1463, %v1438, 0
        %1512 = vmatprep.subr.bf16.mxu0 0
        %1513 = vmatpush1.bf16.msra.mxu0 0
        %1514 = vmatprep.subr.bf16.mxu0 0
        %1515 = vmatpush1.bf16.msra.mxu0 0
        %1516 = vmatprep.subr.bf16.mxu0 0
        %1517 = vmatpush1.bf16.msra.mxu0 0
        %1518 = vmatprep.subr.bf16.mxu0 0
        %1519 = vmatpush1.bf16.msra.mxu0 0
        %1520 = vmatprep.subr.bf16.mxu0 0
        %1521 = vmatpush1.bf16.msra.mxu0 0
        %1522 = vmatprep.subr.bf16.mxu0 0
        %1523 = vmatpush1.bf16.msra.mxu0 0
        %1524 = vmatprep.subr.bf16.mxu0 0
        %1525 = vmatpush1.bf16.msra.mxu0 0
        %1526 = vmatprep.subr.bf16.mxu0 %v1460
        %1527 = vmatpush1.bf16.msra.mxu0 %v1459
        %1528 = vmatprep.subr.bf16.mxu0 0
        %1529 = vmatpush2.bf16.msra.mxu0 0
        %1530 = vmatprep.subr.bf16.mxu0 0
        %1531 = vmatpush2.bf16.msra.mxu0 0
        %1532 = vmatprep.subr.bf16.mxu0 0
        %1533 = vmatpush2.bf16.msra.mxu0 0
        %1534 = vmatprep.subr.bf16.mxu0 0
        %1535 = vmatpush2.bf16.msra.mxu0 0
        %1536 = vmatprep.subr.bf16.mxu0 0
        %1537 = vmatpush2.bf16.msra.mxu0 0
        %1538 = vmatprep.subr.bf16.mxu0 0
        %1539 = vmatpush2.bf16.msra.mxu0 0
        %1540 = vmatprep.subr.bf16.mxu0 0
        %1541 = vmatpush2.bf16.msra.mxu0 0
        %1542 = vmatprep.subr.bf16.mxu0 0
        %1543 = vmatpush2.bf16.msra.mxu0 0
        %1544 = vmatprep.mubr.bf16.mxu0 0
        %1545 = vmatmul.mubr.bf16.gmra.mxu0 %v1465
        %v1546 = vpop.f32.mrf.mxu0
        %v1547 = vadd.f32 %v1446, %v1546
        %v1548 = vpop.f32.mrf.mxu0
        %v1549 = vadd.f32 %v1450, %v1548
        %v1550 = vpop.f32.mrf.mxu0
        %v1551 = vadd.f32 %v1446, %v1550
        %v1552 = vpop.f32.mrf.mxu0
        %v1553 = vadd.f32 %v1450, %v1552
        %1554 = vmatprep.mubr.bf16.mxu0 0
        %1555 = vmatmul.mubr.bf16.gmra.mxu0 %v1468
        %v1556 = vpop.f32.mrf.mxu0
        %v1557 = vadd.f32 %v1446, %v1556
        %v1558 = vpop.f32.mrf.mxu0
        %v1559 = vadd.f32 %v1450, %v1558
        %v1560 = vpop.f32.mrf.mxu0
        %v1561 = vadd.f32 %v1446, %v1560
        %v1562 = vpop.f32.mrf.mxu0
        %v1563 = vadd.f32 %v1450, %v1562
        %1564 = vmatprep.mubr.bf16.mxu0 0
        %1565 = vmatmul.mubr.bf16.gmra.mxu0 %v1471
        %v1566 = vpop.f32.mrf.mxu0
        %v1567 = vadd.f32 %v1446, %v1566
        %v1568 = vpop.f32.mrf.mxu0
        %v1569 = vadd.f32 %v1450, %v1568
        %v1570 = vpop.f32.mrf.mxu0
        %v1571 = vadd.f32 %v1446, %v1570
        %v1572 = vpop.f32.mrf.mxu0
        %v1573 = vadd.f32 %v1450, %v1572
        %1574 = vmatprep.mubr.bf16.mxu0 0
        %1575 = vmatmul.mubr.bf16.gmra.mxu0 %v1474
        %v1576 = vpop.f32.mrf.mxu0
        %v1577 = vadd.f32 %v1446, %v1576
        %v1578 = vpop.f32.mrf.mxu0
        %v1579 = vadd.f32 %v1450, %v1578
        %v1580 = vpop.f32.mrf.mxu0
        %v1581 = vadd.f32 %v1446, %v1580
        %v1582 = vpop.f32.mrf.mxu0
        %v1583 = vadd.f32 %v1450, %v1582
        %1584 = vmatprep.mubr.bf16.mxu0 0
        %1585 = vmatmul.mubr.bf16.gmra.mxu0 %v1477
        %v1586 = vpop.f32.mrf.mxu0
        %v1587 = vadd.f32 %v1446, %v1586
        %v1588 = vpop.f32.mrf.mxu0
        %v1589 = vadd.f32 %v1450, %v1588
        %v1590 = vpop.f32.mrf.mxu0
        %v1591 = vadd.f32 %v1446, %v1590
        %v1592 = vpop.f32.mrf.mxu0
        %v1593 = vadd.f32 %v1450, %v1592
        %1594 = vmatprep.mubr.bf16.mxu0 0
        %1595 = vmatmul.mubr.bf16.gmra.mxu0 %v1480
        %v1596 = vpop.f32.mrf.mxu0
        %v1597 = vadd.f32 %v1446, %v1596
        %v1598 = vpop.f32.mrf.mxu0
        %v1599 = vadd.f32 %v1450, %v1598
        %v1600 = vpop.f32.mrf.mxu0
        %v1601 = vadd.f32 %v1446, %v1600
        %v1602 = vpop.f32.mrf.mxu0
        %v1603 = vadd.f32 %v1450, %v1602
        %1604 = vmatprep.mubr.bf16.mxu0 0
        %1605 = vmatmul.mubr.bf16.gmra.mxu0 %v1483
        %v1606 = vpop.f32.mrf.mxu0
        %v1607 = vadd.f32 %v1446, %v1606
        %v1608 = vpop.f32.mrf.mxu0
        %v1609 = vadd.f32 %v1450, %v1608
        %v1610 = vpop.f32.mrf.mxu0
        %v1611 = vadd.f32 %v1446, %v1610
        %v1612 = vpop.f32.mrf.mxu0
        %v1613 = vadd.f32 %v1450, %v1612
        %1614 = vmatprep.mubr.bf16.mxu0 0
        %1615 = vmatmul.mubr.bf16.gmra.mxu0 %v1486
        %v1616 = vpop.f32.mrf.mxu0
        %v1617 = vadd.f32 %v1446, %v1616
        %v1618 = vpop.f32.mrf.mxu0
        %v1619 = vadd.f32 %v1450, %v1618
        %v1620 = vpop.f32.mrf.mxu0
        %v1621 = vadd.f32 %v1446, %v1620
        %v1622 = vpop.f32.mrf.mxu0
        %v1623 = vadd.f32 %v1450, %v1622
        %1624 = vmatprep.mubr.bf16.mxu0 0
        %1625 = vmatmul.mubr.bf16.gmra.mxu0 %v1489
        %v1626 = vpop.f32.mrf.mxu0
        %v1627 = vadd.f32 %v1446, %v1626
        %v1628 = vpop.f32.mrf.mxu0
        %v1629 = vadd.f32 %v1450, %v1628
        %v1630 = vpop.f32.mrf.mxu0
        %v1631 = vadd.f32 %v1446, %v1630
        %v1632 = vpop.f32.mrf.mxu0
        %v1633 = vadd.f32 %v1450, %v1632
        %1634 = vmatprep.mubr.bf16.mxu0 0
        %1635 = vmatmul.mubr.bf16.gmra.mxu0 %v1492
        %v1636 = vpop.f32.mrf.mxu0
        %v1637 = vadd.f32 %v1446, %v1636
        %v1638 = vpop.f32.mrf.mxu0
        %v1639 = vadd.f32 %v1450, %v1638
        %v1640 = vpop.f32.mrf.mxu0
        %v1641 = vadd.f32 %v1446, %v1640
        %v1642 = vpop.f32.mrf.mxu0
        %v1643 = vadd.f32 %v1450, %v1642
        %1644 = vmatprep.mubr.bf16.mxu0 0
        %1645 = vmatmul.mubr.bf16.gmra.mxu0 %v1495
        %v1646 = vpop.f32.mrf.mxu0
        %v1647 = vadd.f32 %v1446, %v1646
        %v1648 = vpop.f32.mrf.mxu0
        %v1649 = vadd.f32 %v1450, %v1648
        %v1650 = vpop.f32.mrf.mxu0
        %v1651 = vadd.f32 %v1446, %v1650
        %v1652 = vpop.f32.mrf.mxu0
        %v1653 = vadd.f32 %v1450, %v1652
        %1654 = vmatprep.mubr.bf16.mxu0 0
        %1655 = vmatmul.mubr.bf16.gmra.mxu0 %v1498
        %v1656 = vpop.f32.mrf.mxu0
        %v1657 = vadd.f32 %v1446, %v1656
        %v1658 = vpop.f32.mrf.mxu0
        %v1659 = vadd.f32 %v1450, %v1658
        %v1660 = vpop.f32.mrf.mxu0
        %v1661 = vadd.f32 %v1446, %v1660
        %v1662 = vpop.f32.mrf.mxu0
        %v1663 = vadd.f32 %v1450, %v1662
        %1664 = vmatprep.mubr.bf16.mxu0 0
        %1665 = vmatmul.mubr.bf16.gmra.mxu0 %v1501
        %v1666 = vpop.f32.mrf.mxu0
        %v1667 = vadd.f32 %v1446, %v1666
        %v1668 = vpop.f32.mrf.mxu0
        %v1669 = vadd.f32 %v1450, %v1668
        %v1670 = vpop.f32.mrf.mxu0
        %v1671 = vadd.f32 %v1446, %v1670
        %v1672 = vpop.f32.mrf.mxu0
        %v1673 = vadd.f32 %v1450, %v1672
        %1674 = vmatprep.mubr.bf16.mxu0 0
        %1675 = vmatmul.mubr.bf16.gmra.mxu0 %v1504
        %v1676 = vpop.f32.mrf.mxu0
        %v1677 = vadd.f32 %v1446, %v1676
        %v1678 = vpop.f32.mrf.mxu0
        %v1679 = vadd.f32 %v1450, %v1678
        %v1680 = vpop.f32.mrf.mxu0
        %v1681 = vadd.f32 %v1446, %v1680
        %v1682 = vpop.f32.mrf.mxu0
        %v1683 = vadd.f32 %v1450, %v1682
        %1684 = vmatprep.mubr.bf16.mxu0 0
        %1685 = vmatmul.mubr.bf16.gmra.mxu0 %v1507
        %v1686 = vpop.f32.mrf.mxu0
        %v1687 = vadd.f32 %v1446, %v1686
        %v1688 = vpop.f32.mrf.mxu0
        %v1689 = vadd.f32 %v1450, %v1688
        %v1690 = vpop.f32.mrf.mxu0
        %v1691 = vadd.f32 %v1446, %v1690
        %v1692 = vpop.f32.mrf.mxu0
        %v1693 = vadd.f32 %v1450, %v1692
        %1694 = vmatprep.mubr.bf16.mxu0 0
        %1695 = vmatmul.mubr.bf16.gmra.mxu0 %v1510
        %v1696 = vpop.f32.mrf.mxu0
        %v1697 = vadd.f32 %v1446, %v1696
        %v1698 = vpop.f32.mrf.mxu0
        %v1699 = vadd.f32 %v1450, %v1698
        %v1700 = vpop.f32.mrf.mxu0
        %v1701 = vadd.f32 %v1446, %v1700
        %v1702 = vpop.f32.mrf.mxu0
        %v1703 = vadd.f32 %v1450, %v1702
        %1704 = vdwg.mxu0
        %v1705 = vmax.f32 %v1547, 0.0
        %v1706 = vmax.f32 %v1549, 0.0
        %v1707 = vmax.f32 %v1551, 0.0
        %v1708 = vmax.f32 %v1553, 0.0
        %v1709 = vmax.f32 %v1557, 0.0
        %v1710 = vmax.f32 %v1559, 0.0
        %v1711 = vmax.f32 %v1561, 0.0
        %v1712 = vmax.f32 %v1563, 0.0
        %v1713 = vmax.f32 %v1567, 0.0
        %v1714 = vmax.f32 %v1569, 0.0
        %v1715 = vmax.f32 %v1571, 0.0
        %v1716 = vmax.f32 %v1573, 0.0
        %v1717 = vmax.f32 %v1577, 0.0
        %v1718 = vmax.f32 %v1579, 0.0
        %v1719 = vmax.f32 %v1581, 0.0
        %v1720 = vmax.f32 %v1583, 0.0
        %v1721 = vmax.f32 %v1587, 0.0
        %v1722 = vmax.f32 %v1589, 0.0
        %v1723 = vmax.f32 %v1591, 0.0
        %v1724 = vmax.f32 %v1593, 0.0
        %v1725 = vmax.f32 %v1597, 0.0
        %v1726 = vmax.f32 %v1599, 0.0
        %v1727 = vmax.f32 %v1601, 0.0
        %v1728 = vmax.f32 %v1603, 0.0
        %v1729 = vmax.f32 %v1607, 0.0
        %v1730 = vmax.f32 %v1609, 0.0
        %v1731 = vmax.f32 %v1611, 0.0
        %v1732 = vmax.f32 %v1613, 0.0
        %v1733 = vmax.f32 %v1617, 0.0
        %v1734 = vmax.f32 %v1619, 0.0
        %v1735 = vmax.f32 %v1621, 0.0
        %v1736 = vmax.f32 %v1623, 0.0
        %v1737 = vmax.f32 %v1627, 0.0
        %v1738 = vmax.f32 %v1629, 0.0
        %v1739 = vmax.f32 %v1631, 0.0
        %v1740 = vmax.f32 %v1633, 0.0
        %v1741 = vmax.f32 %v1637, 0.0
        %v1742 = vmax.f32 %v1639, 0.0
        %v1743 = vmax.f32 %v1641, 0.0
        %v1744 = vmax.f32 %v1643, 0.0
        %v1745 = vmax.f32 %v1647, 0.0
        %v1746 = vmax.f32 %v1649, 0.0
        %v1747 = vmax.f32 %v1651, 0.0
        %v1748 = vmax.f32 %v1653, 0.0
        %v1749 = vmax.f32 %v1657, 0.0
        %v1750 = vmax.f32 %v1659, 0.0
        %v1751 = vmax.f32 %v1661, 0.0
        %v1752 = vmax.f32 %v1663, 0.0
        %v1753 = vmax.f32 %v1667, 0.0
        %v1754 = vmax.f32 %v1669, 0.0
        %v1755 = vmax.f32 %v1671, 0.0
        %v1756 = vmax.f32 %v1673, 0.0
        %v1757 = vmax.f32 %v1677, 0.0
        %v1758 = vmax.f32 %v1679, 0.0
        %v1759 = vmax.f32 %v1681, 0.0
        %v1760 = vmax.f32 %v1683, 0.0
        %v1761 = vmax.f32 %v1687, 0.0
        %v1762 = vmax.f32 %v1689, 0.0
        %v1763 = vmax.f32 %v1691, 0.0
        %v1764 = vmax.f32 %v1693, 0.0
        %v1765 = vmax.f32 %v1697, 0.0
        %v1766 = vmax.f32 %v1699, 0.0
        %v1767 = vmax.f32 %v1701, 0.0
        %v1768 = vmax.f32 %v1703, 0.0
        %v1769 = vpack.c.bf16 %v1707, %v1705
        %v1770 = vpack.c.bf16 %v1708, %v1706
        %v1771 = vpack.c.bf16 %v1711, %v1709
        %v1772 = vpack.c.bf16 %v1712, %v1710
        %v1773 = vpack.c.bf16 %v1715, %v1713
        %v1774 = vpack.c.bf16 %v1716, %v1714
        %v1775 = vpack.c.bf16 %v1719, %v1717
        %v1776 = vpack.c.bf16 %v1720, %v1718
        %v1777 = vpack.c.bf16 %v1723, %v1721
        %v1778 = vpack.c.bf16 %v1724, %v1722
        %v1779 = vpack.c.bf16 %v1727, %v1725
        %v1780 = vpack.c.bf16 %v1728, %v1726
        %v1781 = vpack.c.bf16 %v1731, %v1729
        %v1782 = vpack.c.bf16 %v1732, %v1730
        %v1783 = vpack.c.bf16 %v1735, %v1733
        %v1784 = vpack.c.bf16 %v1736, %v1734
        %v1785 = vpack.c.bf16 %v1739, %v1737
        %v1786 = vpack.c.bf16 %v1740, %v1738
        %v1787 = vpack.c.bf16 %v1743, %v1741
        %v1788 = vpack.c.bf16 %v1744, %v1742
        %v1789 = vpack.c.bf16 %v1747, %v1745
        %v1790 = vpack.c.bf16 %v1748, %v1746
        %v1791 = vpack.c.bf16 %v1751, %v1749
        %v1792 = vpack.c.bf16 %v1752, %v1750
        %v1793 = vpack.c.bf16 %v1755, %v1753
        %v1794 = vpack.c.bf16 %v1756, %v1754
        %v1795 = vpack.c.bf16 %v1759, %v1757
        %v1796 = vpack.c.bf16 %v1760, %v1758
        %v1797 = vpack.c.bf16 %v1763, %v1761
        %v1798 = vpack.c.bf16 %v1764, %v1762
        %v1799 = vpack.c.bf16 %v1767, %v1765
        %v1800 = vpack.c.bf16 %v1768, %v1766
        %v1801 = vld [vmem:[%s4] sm:$0xff]
        %v1802 = vld [vmem:[%s4 + $0x8] sm:$0xff]
        %v1803 = vld [vmem:[%s4 + $0x10] sm:$0xff]
        %v1804 = vld [vmem:[%s4 + $0x18] sm:$0xff]
        %v1805 = vld [vmem:[%s4 + $0x20] sm:$0xff]
        %v1806 = vld [vmem:[%s4 + $0x28] sm:$0xff]
        %v1807 = vld [vmem:[%s4 + $0x30] sm:$0xff]
        %v1808 = vld [vmem:[%s4 + $0x38] sm:$0xff]
        %v1809 = vld [vmem:[%s4 + $0x40] sm:$0xff]
        %v1810 = vld [vmem:[%s4 + $0x48] sm:$0xff]
        %v1811 = vld [vmem:[%s4 + $0x50] sm:$0xff]
        %v1812 = vld [vmem:[%s4 + $0x58] sm:$0xff]
        %v1813 = vld [vmem:[%s4 + $0x60] sm:$0xff]
        %v1814 = vld [vmem:[%s4 + $0x68] sm:$0xff]
        %v1815 = vld [vmem:[%s4 + $0x70] sm:$0xff]
        %v1816 = vld [vmem:[%s4 + $0x78] sm:$0xff]
        %v1817 = vld [vmem:[%s4 + $0x80] sm:$0xff]
        %v1818 = vld [vmem:[%s4 + $0x88] sm:$0xff]
        %v1819 = vld [vmem:[%s4 + $0x90] sm:$0xff]
        %v1820 = vld [vmem:[%s4 + $0x98] sm:$0xff]
        %v1821 = vld [vmem:[%s4 + $0xa0] sm:$0xff]
        %v1822 = vld [vmem:[%s4 + $0xa8] sm:$0xff]
        %v1823 = vld [vmem:[%s4 + $0xb0] sm:$0xff]
        %v1824 = vld [vmem:[%s4 + $0xb8] sm:$0xff]
        %v1825 = vld [vmem:[%s4 + $0xc0] sm:$0xff]
        %v1826 = vld [vmem:[%s4 + $0xc8] sm:$0xff]
        %v1827 = vld [vmem:[%s4 + $0xd0] sm:$0xff]
        %v1828 = vld [vmem:[%s4 + $0xd8] sm:$0xff]
        %v1829 = vld [vmem:[%s4 + $0xe0] sm:$0xff]
        %v1830 = vld [vmem:[%s4 + $0xe8] sm:$0xff]
        %v1831 = vld [vmem:[%s4 + $0xf0] sm:$0xff]
        %v1832 = vld [vmem:[%s4 + $0xf8] sm:$0xff]
        %v1833 = vld [vmem:[%s5] sm:$0x3]
        %v1835 = vlaneseq
        %v1836 = vshrl.u32 %v1835, 7
        %v1837 = vsub.s32 0, %v1836
        %v1838 = vrot.slane %v1833, %v1837
        %v1839 = vlaneseq
        %v1840 = vshrl.u32 %v1839, 7
        %v1841 = vsub.s32 1, %v1840
        %v1842 = vrot.slane %v1833, %v1841
        %v1877 = vunpack.c.l.b16 %v1801
        %v1878 = vunpack.c.h.b16 %v1801
        %v1879 = vunpack.c.l.b16 %v1802
        %v1880 = vunpack.c.h.b16 %v1802
        %v1881 = vunpack.c.l.b16 %v1803
        %v1882 = vunpack.c.h.b16 %v1803
        %v1883 = vunpack.c.l.b16 %v1804
        %v1884 = vunpack.c.h.b16 %v1804
        %v1885 = vunpack.c.l.b16 %v1805
        %v1886 = vunpack.c.h.b16 %v1805
        %v1887 = vunpack.c.l.b16 %v1806
        %v1888 = vunpack.c.h.b16 %v1806
        %v1889 = vunpack.c.l.b16 %v1807
        %v1890 = vunpack.c.h.b16 %v1807
        %v1891 = vunpack.c.l.b16 %v1808
        %v1892 = vunpack.c.h.b16 %v1808
        %v1893 = vunpack.c.l.b16 %v1809
        %v1894 = vunpack.c.h.b16 %v1809
        %v1895 = vunpack.c.l.b16 %v1810
        %v1896 = vunpack.c.h.b16 %v1810
        %v1897 = vunpack.c.l.b16 %v1811
        %v1898 = vunpack.c.h.b16 %v1811
        %v1899 = vunpack.c.l.b16 %v1812
        %v1900 = vunpack.c.h.b16 %v1812
        %v1901 = vunpack.c.l.b16 %v1813
        %v1902 = vunpack.c.h.b16 %v1813
        %v1903 = vunpack.c.l.b16 %v1814
        %v1904 = vunpack.c.h.b16 %v1814
        %v1905 = vunpack.c.l.b16 %v1815
        %v1906 = vunpack.c.h.b16 %v1815
        %v1907 = vunpack.c.l.b16 %v1816
        %v1908 = vunpack.c.h.b16 %v1816
        %v1909 = vunpack.c.l.b16 %v1817
        %v1910 = vunpack.c.h.b16 %v1817
        %v1911 = vunpack.c.l.b16 %v1818
        %v1912 = vunpack.c.h.b16 %v1818
        %v1913 = vunpack.c.l.b16 %v1819
        %v1914 = vunpack.c.h.b16 %v1819
        %v1915 = vunpack.c.l.b16 %v1820
        %v1916 = vunpack.c.h.b16 %v1820
        %v1917 = vunpack.c.l.b16 %v1821
        %v1918 = vunpack.c.h.b16 %v1821
        %v1919 = vunpack.c.l.b16 %v1822
        %v1920 = vunpack.c.h.b16 %v1822
        %v1921 = vunpack.c.l.b16 %v1823
        %v1922 = vunpack.c.h.b16 %v1823
        %v1923 = vunpack.c.l.b16 %v1824
        %v1924 = vunpack.c.h.b16 %v1824
        %v1925 = vunpack.c.l.b16 %v1825
        %v1926 = vunpack.c.h.b16 %v1825
        %v1927 = vunpack.c.l.b16 %v1826
        %v1928 = vunpack.c.h.b16 %v1826
        %v1929 = vunpack.c.l.b16 %v1827
        %v1930 = vunpack.c.h.b16 %v1827
        %v1931 = vunpack.c.l.b16 %v1828
        %v1932 = vunpack.c.h.b16 %v1828
        %v1933 = vunpack.c.l.b16 %v1829
        %v1934 = vunpack.c.h.b16 %v1829
        %v1935 = vunpack.c.l.b16 %v1830
        %v1936 = vunpack.c.h.b16 %v1830
        %v1937 = vunpack.c.l.b16 %v1831
        %v1938 = vunpack.c.h.b16 %v1831
        %v1939 = vunpack.c.l.b16 %v1832
        %v1940 = vunpack.c.h.b16 %v1832
        %v1941 = vpack.c.b16 %v1879, %v1877
        %v1942 = vpack.c.b16 %v1880, %v1878
        %v1943 = vpack.c.b16 %v1883, %v1881
        %v1944 = vpack.c.b16 %v1884, %v1882
        %v1945 = vpack.c.b16 %v1887, %v1885
        %v1946 = vpack.c.b16 %v1888, %v1886
        %v1947 = vpack.c.b16 %v1891, %v1889
        %v1948 = vpack.c.b16 %v1892, %v1890
        %v1949 = vpack.c.b16 %v1895, %v1893
        %v1950 = vpack.c.b16 %v1896, %v1894
        %v1951 = vpack.c.b16 %v1899, %v1897
        %v1952 = vpack.c.b16 %v1900, %v1898
        %v1953 = vpack.c.b16 %v1903, %v1901
        %v1954 = vpack.c.b16 %v1904, %v1902
        %v1955 = vpack.c.b16 %v1907, %v1905
        %v1956 = vpack.c.b16 %v1908, %v1906
        %v1957 = vpack.c.b16 %v1911, %v1909
        %v1958 = vpack.c.b16 %v1912, %v1910
        %v1959 = vpack.c.b16 %v1915, %v1913
        %v1960 = vpack.c.b16 %v1916, %v1914
        %v1961 = vpack.c.b16 %v1919, %v1917
        %v1962 = vpack.c.b16 %v1920, %v1918
        %v1963 = vpack.c.b16 %v1923, %v1921
        %v1964 = vpack.c.b16 %v1924, %v1922
        %v1965 = vpack.c.b16 %v1927, %v1925
        %v1966 = vpack.c.b16 %v1928, %v1926
        %v1967 = vpack.c.b16 %v1931, %v1929
        %v1968 = vpack.c.b16 %v1932, %v1930
        %v1969 = vpack.c.b16 %v1935, %v1933
        %v1970 = vpack.c.b16 %v1936, %v1934
        %v1971 = vpack.c.b16 %v1939, %v1937
        %v1972 = vpack.c.b16 %v1940, %v1938
        %2005 = vmatprep.subr.bf16.mxu0 %v1956
        %2006 = vmatpush1.bf16.msra.mxu0 %v1955
        %2007 = vmatprep.subr.bf16.mxu0 %v1954
        %2008 = vmatpush1.bf16.msra.mxu0 %v1953
        %2009 = vmatprep.subr.bf16.mxu0 %v1952
        %2010 = vmatpush1.bf16.msra.mxu0 %v1951
        %2011 = vmatprep.subr.bf16.mxu0 %v1950
        %2012 = vmatpush1.bf16.msra.mxu0 %v1949
        %2013 = vmatprep.subr.bf16.mxu0 %v1948
        %2014 = vmatpush1.bf16.msra.mxu0 %v1947
        %2015 = vmatprep.subr.bf16.mxu0 %v1946
        %2016 = vmatpush1.bf16.msra.mxu0 %v1945
        %2017 = vmatprep.subr.bf16.mxu0 %v1944
        %2018 = vmatpush1.bf16.msra.mxu0 %v1943
        %2019 = vmatprep.subr.bf16.mxu0 %v1942
        %2020 = vmatpush1.bf16.msra.mxu0 %v1941
        %2021 = vmatprep.subr.bf16.mxu0 %v1972
        %2022 = vmatpush2.bf16.msra.mxu0 %v1971
        %2023 = vmatprep.subr.bf16.mxu0 %v1970
        %2024 = vmatpush2.bf16.msra.mxu0 %v1969
        %2025 = vmatprep.subr.bf16.mxu0 %v1968
        %2026 = vmatpush2.bf16.msra.mxu0 %v1967
        %2027 = vmatprep.subr.bf16.mxu0 %v1966
        %2028 = vmatpush2.bf16.msra.mxu0 %v1965
        %2029 = vmatprep.subr.bf16.mxu0 %v1964
        %2030 = vmatpush2.bf16.msra.mxu0 %v1963
        %2031 = vmatprep.subr.bf16.mxu0 %v1962
        %2032 = vmatpush2.bf16.msra.mxu0 %v1961
        %2033 = vmatprep.subr.bf16.mxu0 %v1960
        %2034 = vmatpush2.bf16.msra.mxu0 %v1959
        %2035 = vmatprep.subr.bf16.mxu0 %v1958
        %2036 = vmatpush2.bf16.msra.mxu0 %v1957
        %2037 = vmatprep.mubr.bf16.mxu0 %v1770
        %2038 = vmatmul.mubr.bf16.gmra.mxu0 %v1769
        %v2039 = vpop.f32.mrf.mxu0
        %v2040 = vadd.f32 %v1838, %v2039
        %v2041 = vpop.f32.mrf.mxu0
        %v2042 = vadd.f32 %v1842, %v2041
        %v2043 = vpop.f32.mrf.mxu0
        %v2044 = vadd.f32 %v1838, %v2043
        %v2045 = vpop.f32.mrf.mxu0
        %v2046 = vadd.f32 %v1842, %v2045
        %2047 = vmatprep.mubr.bf16.mxu0 %v1772
        %2048 = vmatmul.mubr.bf16.gmra.mxu0 %v1771
        %v2049 = vpop.f32.mrf.mxu0
        %v2050 = vadd.f32 %v1838, %v2049
        %v2051 = vpop.f32.mrf.mxu0
        %v2052 = vadd.f32 %v1842, %v2051
        %v2053 = vpop.f32.mrf.mxu0
        %v2054 = vadd.f32 %v1838, %v2053
        %v2055 = vpop.f32.mrf.mxu0
        %v2056 = vadd.f32 %v1842, %v2055
        %2057 = vmatprep.mubr.bf16.mxu0 %v1774
        %2058 = vmatmul.mubr.bf16.gmra.mxu0 %v1773
        %v2059 = vpop.f32.mrf.mxu0
        %v2060 = vadd.f32 %v1838, %v2059
        %v2061 = vpop.f32.mrf.mxu0
        %v2062 = vadd.f32 %v1842, %v2061
        %v2063 = vpop.f32.mrf.mxu0
        %v2064 = vadd.f32 %v1838, %v2063
        %v2065 = vpop.f32.mrf.mxu0
        %v2066 = vadd.f32 %v1842, %v2065
        %2067 = vmatprep.mubr.bf16.mxu0 %v1776
        %2068 = vmatmul.mubr.bf16.gmra.mxu0 %v1775
        %v2069 = vpop.f32.mrf.mxu0
        %v2070 = vadd.f32 %v1838, %v2069
        %v2071 = vpop.f32.mrf.mxu0
        %v2072 = vadd.f32 %v1842, %v2071
        %v2073 = vpop.f32.mrf.mxu0
        %v2074 = vadd.f32 %v1838, %v2073
        %v2075 = vpop.f32.mrf.mxu0
        %v2076 = vadd.f32 %v1842, %v2075
        %2077 = vmatprep.mubr.bf16.mxu0 %v1778
        %2078 = vmatmul.mubr.bf16.gmra.mxu0 %v1777
        %v2079 = vpop.f32.mrf.mxu0
        %v2080 = vadd.f32 %v1838, %v2079
        %v2081 = vpop.f32.mrf.mxu0
        %v2082 = vadd.f32 %v1842, %v2081
        %v2083 = vpop.f32.mrf.mxu0
        %v2084 = vadd.f32 %v1838, %v2083
        %v2085 = vpop.f32.mrf.mxu0
        %v2086 = vadd.f32 %v1842, %v2085
        %2087 = vmatprep.mubr.bf16.mxu0 %v1780
        %2088 = vmatmul.mubr.bf16.gmra.mxu0 %v1779
        %v2089 = vpop.f32.mrf.mxu0
        %v2090 = vadd.f32 %v1838, %v2089
        %v2091 = vpop.f32.mrf.mxu0
        %v2092 = vadd.f32 %v1842, %v2091
        %v2093 = vpop.f32.mrf.mxu0
        %v2094 = vadd.f32 %v1838, %v2093
        %v2095 = vpop.f32.mrf.mxu0
        %v2096 = vadd.f32 %v1842, %v2095
        %2097 = vmatprep.mubr.bf16.mxu0 %v1782
        %2098 = vmatmul.mubr.bf16.gmra.mxu0 %v1781
        %v2099 = vpop.f32.mrf.mxu0
        %v2100 = vadd.f32 %v1838, %v2099
        %v2101 = vpop.f32.mrf.mxu0
        %v2102 = vadd.f32 %v1842, %v2101
        %v2103 = vpop.f32.mrf.mxu0
        %v2104 = vadd.f32 %v1838, %v2103
        %v2105 = vpop.f32.mrf.mxu0
        %v2106 = vadd.f32 %v1842, %v2105
        %2107 = vmatprep.mubr.bf16.mxu0 %v1784
        %2108 = vmatmul.mubr.bf16.gmra.mxu0 %v1783
        %v2109 = vpop.f32.mrf.mxu0
        %v2110 = vadd.f32 %v1838, %v2109
        %v2111 = vpop.f32.mrf.mxu0
        %v2112 = vadd.f32 %v1842, %v2111
        %v2113 = vpop.f32.mrf.mxu0
        %v2114 = vadd.f32 %v1838, %v2113
        %v2115 = vpop.f32.mrf.mxu0
        %v2116 = vadd.f32 %v1842, %v2115
        %2117 = vmatprep.mubr.bf16.mxu0 %v1786
        %2118 = vmatmul.mubr.bf16.gmra.mxu0 %v1785
        %v2119 = vpop.f32.mrf.mxu0
        %v2120 = vadd.f32 %v1838, %v2119
        %v2121 = vpop.f32.mrf.mxu0
        %v2122 = vadd.f32 %v1842, %v2121
        %v2123 = vpop.f32.mrf.mxu0
        %v2124 = vadd.f32 %v1838, %v2123
        %v2125 = vpop.f32.mrf.mxu0
        %v2126 = vadd.f32 %v1842, %v2125
        %2127 = vmatprep.mubr.bf16.mxu0 %v1788
        %2128 = vmatmul.mubr.bf16.gmra.mxu0 %v1787
        %v2129 = vpop.f32.mrf.mxu0
        %v2130 = vadd.f32 %v1838, %v2129
        %v2131 = vpop.f32.mrf.mxu0
        %v2132 = vadd.f32 %v1842, %v2131
        %v2133 = vpop.f32.mrf.mxu0
        %v2134 = vadd.f32 %v1838, %v2133
        %v2135 = vpop.f32.mrf.mxu0
        %v2136 = vadd.f32 %v1842, %v2135
        %2137 = vmatprep.mubr.bf16.mxu0 %v1790
        %2138 = vmatmul.mubr.bf16.gmra.mxu0 %v1789
        %v2139 = vpop.f32.mrf.mxu0
        %v2140 = vadd.f32 %v1838, %v2139
        %v2141 = vpop.f32.mrf.mxu0
        %v2142 = vadd.f32 %v1842, %v2141
        %v2143 = vpop.f32.mrf.mxu0
        %v2144 = vadd.f32 %v1838, %v2143
        %v2145 = vpop.f32.mrf.mxu0
        %v2146 = vadd.f32 %v1842, %v2145
        %2147 = vmatprep.mubr.bf16.mxu0 %v1792
        %2148 = vmatmul.mubr.bf16.gmra.mxu0 %v1791
        %v2149 = vpop.f32.mrf.mxu0
        %v2150 = vadd.f32 %v1838, %v2149
        %v2151 = vpop.f32.mrf.mxu0
        %v2152 = vadd.f32 %v1842, %v2151
        %v2153 = vpop.f32.mrf.mxu0
        %v2154 = vadd.f32 %v1838, %v2153
        %v2155 = vpop.f32.mrf.mxu0
        %v2156 = vadd.f32 %v1842, %v2155
        %2157 = vmatprep.mubr.bf16.mxu0 %v1794
        %2158 = vmatmul.mubr.bf16.gmra.mxu0 %v1793
        %v2159 = vpop.f32.mrf.mxu0
        %v2160 = vadd.f32 %v1838, %v2159
        %v2161 = vpop.f32.mrf.mxu0
        %v2162 = vadd.f32 %v1842, %v2161
        %v2163 = vpop.f32.mrf.mxu0
        %v2164 = vadd.f32 %v1838, %v2163
        %v2165 = vpop.f32.mrf.mxu0
        %v2166 = vadd.f32 %v1842, %v2165
        %2167 = vmatprep.mubr.bf16.mxu0 %v1796
        %2168 = vmatmul.mubr.bf16.gmra.mxu0 %v1795
        %v2169 = vpop.f32.mrf.mxu0
        %v2170 = vadd.f32 %v1838, %v2169
        %v2171 = vpop.f32.mrf.mxu0
        %v2172 = vadd.f32 %v1842, %v2171
        %v2173 = vpop.f32.mrf.mxu0
        %v2174 = vadd.f32 %v1838, %v2173
        %v2175 = vpop.f32.mrf.mxu0
        %v2176 = vadd.f32 %v1842, %v2175
        %2177 = vmatprep.mubr.bf16.mxu0 %v1798
        %2178 = vmatmul.mubr.bf16.gmra.mxu0 %v1797
        %v2179 = vpop.f32.mrf.mxu0
        %v2180 = vadd.f32 %v1838, %v2179
        %v2181 = vpop.f32.mrf.mxu0
        %v2182 = vadd.f32 %v1842, %v2181
        %v2183 = vpop.f32.mrf.mxu0
        %v2184 = vadd.f32 %v1838, %v2183
        %v2185 = vpop.f32.mrf.mxu0
        %v2186 = vadd.f32 %v1842, %v2185
        %2187 = vmatprep.mubr.bf16.mxu0 %v1800
        %2188 = vmatmul.mubr.bf16.gmra.mxu0 %v1799
        %v2189 = vpop.f32.mrf.mxu0
        %v2190 = vadd.f32 %v1838, %v2189
        %v2191 = vpop.f32.mrf.mxu0
        %v2192 = vadd.f32 %v1842, %v2191
        %v2193 = vpop.f32.mrf.mxu0
        %v2194 = vadd.f32 %v1838, %v2193
        %v2195 = vpop.f32.mrf.mxu0
        %v2196 = vadd.f32 %v1842, %v2195
        %2197 = vdwg.mxu0
        %v2198 = vmax.f32 %v2040, 0.0
        %v2199 = vmax.f32 %v2042, 0.0
        %v2200 = vmax.f32 %v2044, 0.0
        %v2201 = vmax.f32 %v2046, 0.0
        %v2202 = vmax.f32 %v2050, 0.0
        %v2203 = vmax.f32 %v2052, 0.0
        %v2204 = vmax.f32 %v2054, 0.0
        %v2205 = vmax.f32 %v2056, 0.0
        %v2206 = vmax.f32 %v2060, 0.0
        %v2207 = vmax.f32 %v2062, 0.0
        %v2208 = vmax.f32 %v2064, 0.0
        %v2209 = vmax.f32 %v2066, 0.0
        %v2210 = vmax.f32 %v2070, 0.0
        %v2211 = vmax.f32 %v2072, 0.0
        %v2212 = vmax.f32 %v2074, 0.0
        %v2213 = vmax.f32 %v2076, 0.0
        %v2214 = vmax.f32 %v2080, 0.0
        %v2215 = vmax.f32 %v2082, 0.0
        %v2216 = vmax.f32 %v2084, 0.0
        %v2217 = vmax.f32 %v2086, 0.0
        %v2218 = vmax.f32 %v2090, 0.0
        %v2219 = vmax.f32 %v2092, 0.0
        %v2220 = vmax.f32 %v2094, 0.0
        %v2221 = vmax.f32 %v2096, 0.0
        %v2222 = vmax.f32 %v2100, 0.0
        %v2223 = vmax.f32 %v2102, 0.0
        %v2224 = vmax.f32 %v2104, 0.0
        %v2225 = vmax.f32 %v2106, 0.0
        %v2226 = vmax.f32 %v2110, 0.0
        %v2227 = vmax.f32 %v2112, 0.0
        %v2228 = vmax.f32 %v2114, 0.0
        %v2229 = vmax.f32 %v2116, 0.0
        %v2230 = vmax.f32 %v2120, 0.0
        %v2231 = vmax.f32 %v2122, 0.0
        %v2232 = vmax.f32 %v2124, 0.0
        %v2233 = vmax.f32 %v2126, 0.0
        %v2234 = vmax.f32 %v2130, 0.0
        %v2235 = vmax.f32 %v2132, 0.0
        %v2236 = vmax.f32 %v2134, 0.0
        %v2237 = vmax.f32 %v2136, 0.0
        %v2238 = vmax.f32 %v2140, 0.0
        %v2239 = vmax.f32 %v2142, 0.0
        %v2240 = vmax.f32 %v2144, 0.0
        %v2241 = vmax.f32 %v2146, 0.0
        %v2242 = vmax.f32 %v2150, 0.0
        %v2243 = vmax.f32 %v2152, 0.0
        %v2244 = vmax.f32 %v2154, 0.0
        %v2245 = vmax.f32 %v2156, 0.0
        %v2246 = vmax.f32 %v2160, 0.0
        %v2247 = vmax.f32 %v2162, 0.0
        %v2248 = vmax.f32 %v2164, 0.0
        %v2249 = vmax.f32 %v2166, 0.0
        %v2250 = vmax.f32 %v2170, 0.0
        %v2251 = vmax.f32 %v2172, 0.0
        %v2252 = vmax.f32 %v2174, 0.0
        %v2253 = vmax.f32 %v2176, 0.0
        %v2254 = vmax.f32 %v2180, 0.0
        %v2255 = vmax.f32 %v2182, 0.0
        %v2256 = vmax.f32 %v2184, 0.0
        %v2257 = vmax.f32 %v2186, 0.0
        %v2258 = vmax.f32 %v2190, 0.0
        %v2259 = vmax.f32 %v2192, 0.0
        %v2260 = vmax.f32 %v2194, 0.0
        %v2261 = vmax.f32 %v2196, 0.0
        %v2262 = vld [vmem:[%s6] sm:$0x3]
        %v2264 = vlaneseq
        %v2265 = vshrl.u32 %v2264, 7
        %v2266 = vsub.s32 0, %v2265
        %v2267 = vrot.slane %v2262, %v2266
        %v2268 = vlaneseq
        %v2269 = vshrl.u32 %v2268, 7
        %v2270 = vsub.s32 1, %v2269
        %v2271 = vrot.slane %v2262, %v2270
        %v2274 = vmul.f32 %v2198, %v2267
        %v2275 = vmul.f32 %v2199, %v2271
        %v2276 = vmul.f32 %v2200, %v2267
        %v2277 = vmul.f32 %v2201, %v2271
        %v2278 = vmul.f32 %v2202, %v2267
        %v2279 = vmul.f32 %v2203, %v2271
        %v2280 = vmul.f32 %v2204, %v2267
        %v2281 = vmul.f32 %v2205, %v2271
        %v2282 = vmul.f32 %v2206, %v2267
        %v2283 = vmul.f32 %v2207, %v2271
        %v2284 = vmul.f32 %v2208, %v2267
        %v2285 = vmul.f32 %v2209, %v2271
        %v2286 = vmul.f32 %v2210, %v2267
        %v2287 = vmul.f32 %v2211, %v2271
        %v2288 = vmul.f32 %v2212, %v2267
        %v2289 = vmul.f32 %v2213, %v2271
        %v2290 = vmul.f32 %v2214, %v2267
        %v2291 = vmul.f32 %v2215, %v2271
        %v2292 = vmul.f32 %v2216, %v2267
        %v2293 = vmul.f32 %v2217, %v2271
        %v2294 = vmul.f32 %v2218, %v2267
        %v2295 = vmul.f32 %v2219, %v2271
        %v2296 = vmul.f32 %v2220, %v2267
        %v2297 = vmul.f32 %v2221, %v2271
        %v2298 = vmul.f32 %v2222, %v2267
        %v2299 = vmul.f32 %v2223, %v2271
        %v2300 = vmul.f32 %v2224, %v2267
        %v2301 = vmul.f32 %v2225, %v2271
        %v2302 = vmul.f32 %v2226, %v2267
        %v2303 = vmul.f32 %v2227, %v2271
        %v2304 = vmul.f32 %v2228, %v2267
        %v2305 = vmul.f32 %v2229, %v2271
        %v2306 = vmul.f32 %v2230, %v2267
        %v2307 = vmul.f32 %v2231, %v2271
        %v2308 = vmul.f32 %v2232, %v2267
        %v2309 = vmul.f32 %v2233, %v2271
        %v2310 = vmul.f32 %v2234, %v2267
        %v2311 = vmul.f32 %v2235, %v2271
        %v2312 = vmul.f32 %v2236, %v2267
        %v2313 = vmul.f32 %v2237, %v2271
        %v2314 = vmul.f32 %v2238, %v2267
        %v2315 = vmul.f32 %v2239, %v2271
        %v2316 = vmul.f32 %v2240, %v2267
        %v2317 = vmul.f32 %v2241, %v2271
        %v2318 = vmul.f32 %v2242, %v2267
        %v2319 = vmul.f32 %v2243, %v2271
        %v2320 = vmul.f32 %v2244, %v2267
        %v2321 = vmul.f32 %v2245, %v2271
        %v2322 = vmul.f32 %v2246, %v2267
        %v2323 = vmul.f32 %v2247, %v2271
        %v2324 = vmul.f32 %v2248, %v2267
        %v2325 = vmul.f32 %v2249, %v2271
        %v2326 = vmul.f32 %v2250, %v2267
        %v2327 = vmul.f32 %v2251, %v2271
        %v2328 = vmul.f32 %v2252, %v2267
        %v2329 = vmul.f32 %v2253, %v2271
        %v2330 = vmul.f32 %v2254, %v2267
        %v2331 = vmul.f32 %v2255, %v2271
        %v2332 = vmul.f32 %v2256, %v2267
        %v2333 = vmul.f32 %v2257, %v2271
        %v2334 = vmul.f32 %v2258, %v2267
        %v2335 = vmul.f32 %v2259, %v2271
        %v2336 = vmul.f32 %v2260, %v2267
        %v2337 = vmul.f32 %v2261, %v2271
        %v2338 = vld [vmem:[%s7] sm:$0x3]
        %v2340 = vlaneseq
        %v2341 = vshrl.u32 %v2340, 7
        %v2342 = vsub.s32 0, %v2341
        %v2343 = vrot.slane %v2338, %v2342
        %v2344 = vlaneseq
        %v2345 = vshrl.u32 %v2344, 7
        %v2346 = vsub.s32 1, %v2345
        %v2347 = vrot.slane %v2338, %v2346
        %v2350 = vadd.f32 %v2274, %v2343
        %v2351 = vadd.f32 %v2275, %v2347
        %v2352 = vadd.f32 %v2276, %v2343
        %v2353 = vadd.f32 %v2277, %v2347
        %v2354 = vadd.f32 %v2278, %v2343
        %v2355 = vadd.f32 %v2279, %v2347
        %v2356 = vadd.f32 %v2280, %v2343
        %v2357 = vadd.f32 %v2281, %v2347
        %v2358 = vadd.f32 %v2282, %v2343
        %v2359 = vadd.f32 %v2283, %v2347
        %v2360 = vadd.f32 %v2284, %v2343
        %v2361 = vadd.f32 %v2285, %v2347
        %v2362 = vadd.f32 %v2286, %v2343
        %v2363 = vadd.f32 %v2287, %v2347
        %v2364 = vadd.f32 %v2288, %v2343
        %v2365 = vadd.f32 %v2289, %v2347
        %v2366 = vadd.f32 %v2290, %v2343
        %v2367 = vadd.f32 %v2291, %v2347
        %v2368 = vadd.f32 %v2292, %v2343
        %v2369 = vadd.f32 %v2293, %v2347
        %v2370 = vadd.f32 %v2294, %v2343
        %v2371 = vadd.f32 %v2295, %v2347
        %v2372 = vadd.f32 %v2296, %v2343
        %v2373 = vadd.f32 %v2297, %v2347
        %v2374 = vadd.f32 %v2298, %v2343
        %v2375 = vadd.f32 %v2299, %v2347
        %v2376 = vadd.f32 %v2300, %v2343
        %v2377 = vadd.f32 %v2301, %v2347
        %v2378 = vadd.f32 %v2302, %v2343
        %v2379 = vadd.f32 %v2303, %v2347
        %v2380 = vadd.f32 %v2304, %v2343
        %v2381 = vadd.f32 %v2305, %v2347
        %v2382 = vadd.f32 %v2306, %v2343
        %v2383 = vadd.f32 %v2307, %v2347
        %v2384 = vadd.f32 %v2308, %v2343
        %v2385 = vadd.f32 %v2309, %v2347
        %v2386 = vadd.f32 %v2310, %v2343
        %v2387 = vadd.f32 %v2311, %v2347
        %v2388 = vadd.f32 %v2312, %v2343
        %v2389 = vadd.f32 %v2313, %v2347
        %v2390 = vadd.f32 %v2314, %v2343
        %v2391 = vadd.f32 %v2315, %v2347
        %v2392 = vadd.f32 %v2316, %v2343
        %v2393 = vadd.f32 %v2317, %v2347
        %v2394 = vadd.f32 %v2318, %v2343
        %v2395 = vadd.f32 %v2319, %v2347
        %v2396 = vadd.f32 %v2320, %v2343
        %v2397 = vadd.f32 %v2321, %v2347
        %v2398 = vadd.f32 %v2322, %v2343
        %v2399 = vadd.f32 %v2323, %v2347
        %v2400 = vadd.f32 %v2324, %v2343
        %v2401 = vadd.f32 %v2325, %v2347
        %v2402 = vadd.f32 %v2326, %v2343
        %v2403 = vadd.f32 %v2327, %v2347
        %v2404 = vadd.f32 %v2328, %v2343
        %v2405 = vadd.f32 %v2329, %v2347
        %v2406 = vadd.f32 %v2330, %v2343
        %v2407 = vadd.f32 %v2331, %v2347
        %v2408 = vadd.f32 %v2332, %v2343
        %v2409 = vadd.f32 %v2333, %v2347
        %v2410 = vadd.f32 %v2334, %v2343
        %v2411 = vadd.f32 %v2335, %v2347
        %v2412 = vadd.f32 %v2336, %v2343
        %v2413 = vadd.f32 %v2337, %v2347
        %v2414 = vpack.c.bf16 %v2352, %v2350
        %v2415 = vpack.c.bf16 %v2353, %v2351
        %v2416 = vpack.c.bf16 %v2356, %v2354
        %v2417 = vpack.c.bf16 %v2357, %v2355
        %v2418 = vpack.c.bf16 %v2360, %v2358
        %v2419 = vpack.c.bf16 %v2361, %v2359
        %v2420 = vpack.c.bf16 %v2364, %v2362
        %v2421 = vpack.c.bf16 %v2365, %v2363
        %v2422 = vpack.c.bf16 %v2368, %v2366
        %v2423 = vpack.c.bf16 %v2369, %v2367
        %v2424 = vpack.c.bf16 %v2372, %v2370
        %v2425 = vpack.c.bf16 %v2373, %v2371
        %v2426 = vpack.c.bf16 %v2376, %v2374
        %v2427 = vpack.c.bf16 %v2377, %v2375
        %v2428 = vpack.c.bf16 %v2380, %v2378
        %v2429 = vpack.c.bf16 %v2381, %v2379
        %v2430 = vpack.c.bf16 %v2384, %v2382
        %v2431 = vpack.c.bf16 %v2385, %v2383
        %v2432 = vpack.c.bf16 %v2388, %v2386
        %v2433 = vpack.c.bf16 %v2389, %v2387
        %v2434 = vpack.c.bf16 %v2392, %v2390
        %v2435 = vpack.c.bf16 %v2393, %v2391
        %v2436 = vpack.c.bf16 %v2396, %v2394
        %v2437 = vpack.c.bf16 %v2397, %v2395
        %v2438 = vpack.c.bf16 %v2400, %v2398
        %v2439 = vpack.c.bf16 %v2401, %v2399
        %v2440 = vpack.c.bf16 %v2404, %v2402
        %v2441 = vpack.c.bf16 %v2405, %v2403
        %v2442 = vpack.c.bf16 %v2408, %v2406
        %v2443 = vpack.c.bf16 %v2409, %v2407
        %v2444 = vpack.c.bf16 %v2412, %v2410
        %v2445 = vpack.c.bf16 %v2413, %v2411
        %v2478 = vunpack.c.l.b16 %v2414
        %v2479 = vunpack.c.l.b16 %v2415
        %v2480 = vunpack.c.h.b16 %v2414
        %v2481 = vunpack.c.h.b16 %v2415
        %v2482 = vunpack.c.l.b16 %v2416
        %v2483 = vunpack.c.l.b16 %v2417
        %v2484 = vunpack.c.h.b16 %v2416
        %v2485 = vunpack.c.h.b16 %v2417
        %v2486 = vunpack.c.l.b16 %v2418
        %v2487 = vunpack.c.l.b16 %v2419
        %v2488 = vunpack.c.h.b16 %v2418
        %v2489 = vunpack.c.h.b16 %v2419
        %v2490 = vunpack.c.l.b16 %v2420
        %v2491 = vunpack.c.l.b16 %v2421
        %v2492 = vunpack.c.h.b16 %v2420
        %v2493 = vunpack.c.h.b16 %v2421
        %v2494 = vunpack.c.l.b16 %v2422
        %v2495 = vunpack.c.l.b16 %v2423
        %v2496 = vunpack.c.h.b16 %v2422
        %v2497 = vunpack.c.h.b16 %v2423
        %v2498 = vunpack.c.l.b16 %v2424
        %v2499 = vunpack.c.l.b16 %v2425
        %v2500 = vunpack.c.h.b16 %v2424
        %v2501 = vunpack.c.h.b16 %v2425
        %v2502 = vunpack.c.l.b16 %v2426
        %v2503 = vunpack.c.l.b16 %v2427
        %v2504 = vunpack.c.h.b16 %v2426
        %v2505 = vunpack.c.h.b16 %v2427
        %v2506 = vunpack.c.l.b16 %v2428
        %v2507 = vunpack.c.l.b16 %v2429
        %v2508 = vunpack.c.h.b16 %v2428
        %v2509 = vunpack.c.h.b16 %v2429
        %v2510 = vunpack.c.l.b16 %v2430
        %v2511 = vunpack.c.l.b16 %v2431
        %v2512 = vunpack.c.h.b16 %v2430
        %v2513 = vunpack.c.h.b16 %v2431
        %v2514 = vunpack.c.l.b16 %v2432
        %v2515 = vunpack.c.l.b16 %v2433
        %v2516 = vunpack.c.h.b16 %v2432
        %v2517 = vunpack.c.h.b16 %v2433
        %v2518 = vunpack.c.l.b16 %v2434
        %v2519 = vunpack.c.l.b16 %v2435
        %v2520 = vunpack.c.h.b16 %v2434
        %v2521 = vunpack.c.h.b16 %v2435
        %v2522 = vunpack.c.l.b16 %v2436
        %v2523 = vunpack.c.l.b16 %v2437
        %v2524 = vunpack.c.h.b16 %v2436
        %v2525 = vunpack.c.h.b16 %v2437
        %v2526 = vunpack.c.l.b16 %v2438
        %v2527 = vunpack.c.l.b16 %v2439
        %v2528 = vunpack.c.h.b16 %v2438
        %v2529 = vunpack.c.h.b16 %v2439
        %v2530 = vunpack.c.l.b16 %v2440
        %v2531 = vunpack.c.l.b16 %v2441
        %v2532 = vunpack.c.h.b16 %v2440
        %v2533 = vunpack.c.h.b16 %v2441
        %v2534 = vunpack.c.l.b16 %v2442
        %v2535 = vunpack.c.l.b16 %v2443
        %v2536 = vunpack.c.h.b16 %v2442
        %v2537 = vunpack.c.h.b16 %v2443
        %v2538 = vunpack.c.l.b16 %v2444
        %v2539 = vunpack.c.l.b16 %v2445
        %v2540 = vunpack.c.h.b16 %v2444
        %v2541 = vunpack.c.h.b16 %v2445
        %v2542 = vpack.c.b16 %v2479, %v2478
        %v2543 = vpack.c.b16 %v2481, %v2480
        %v2544 = vpack.c.b16 %v2483, %v2482
        %v2545 = vpack.c.b16 %v2485, %v2484
        %v2546 = vpack.c.b16 %v2487, %v2486
        %v2547 = vpack.c.b16 %v2489, %v2488
        %v2548 = vpack.c.b16 %v2491, %v2490
        %v2549 = vpack.c.b16 %v2493, %v2492
        %v2550 = vpack.c.b16 %v2495, %v2494
        %v2551 = vpack.c.b16 %v2497, %v2496
        %v2552 = vpack.c.b16 %v2499, %v2498
        %v2553 = vpack.c.b16 %v2501, %v2500
        %v2554 = vpack.c.b16 %v2503, %v2502
        %v2555 = vpack.c.b16 %v2505, %v2504
        %v2556 = vpack.c.b16 %v2507, %v2506
        %v2557 = vpack.c.b16 %v2509, %v2508
        %v2558 = vpack.c.b16 %v2511, %v2510
        %v2559 = vpack.c.b16 %v2513, %v2512
        %v2560 = vpack.c.b16 %v2515, %v2514
        %v2561 = vpack.c.b16 %v2517, %v2516
        %v2562 = vpack.c.b16 %v2519, %v2518
        %v2563 = vpack.c.b16 %v2521, %v2520
        %v2564 = vpack.c.b16 %v2523, %v2522
        %v2565 = vpack.c.b16 %v2525, %v2524
        %v2566 = vpack.c.b16 %v2527, %v2526
        %v2567 = vpack.c.b16 %v2529, %v2528
        %v2568 = vpack.c.b16 %v2531, %v2530
        %v2569 = vpack.c.b16 %v2533, %v2532
        %v2570 = vpack.c.b16 %v2535, %v2534
        %v2571 = vpack.c.b16 %v2537, %v2536
        %v2572 = vpack.c.b16 %v2539, %v2538
        %v2573 = vpack.c.b16 %v2541, %v2540
        %2606 = vst [vmem:[%s324] sm:$0xff] %v2542
        %2607 = vst [vmem:[%s324 + $0x8] sm:$0xff] %v2543
        %2608 = vst [vmem:[%s324 + $0x10] sm:$0xff] %v2544
        %2609 = vst [vmem:[%s324 + $0x18] sm:$0xff] %v2545
        %2610 = vst [vmem:[%s324 + $0x20] sm:$0xff] %v2546
        %2611 = vst [vmem:[%s324 + $0x28] sm:$0xff] %v2547
        %2612 = vst [vmem:[%s324 + $0x30] sm:$0xff] %v2548
        %2613 = vst [vmem:[%s324 + $0x38] sm:$0xff] %v2549
        %2614 = vst [vmem:[%s324 + $0x40] sm:$0xff] %v2550
        %2615 = vst [vmem:[%s324 + $0x48] sm:$0xff] %v2551
        %2616 = vst [vmem:[%s324 + $0x50] sm:$0xff] %v2552
        %2617 = vst [vmem:[%s324 + $0x58] sm:$0xff] %v2553
        %2618 = vst [vmem:[%s324 + $0x60] sm:$0xff] %v2554
        %2619 = vst [vmem:[%s324 + $0x68] sm:$0xff] %v2555
        %2620 = vst [vmem:[%s324 + $0x70] sm:$0xff] %v2556
        %2621 = vst [vmem:[%s324 + $0x78] sm:$0xff] %v2557
        %2622 = vst [vmem:[%s324 + $0x80] sm:$0xff] %v2558
        %2623 = vst [vmem:[%s324 + $0x88] sm:$0xff] %v2559
        %2624 = vst [vmem:[%s324 + $0x90] sm:$0xff] %v2560
        %2625 = vst [vmem:[%s324 + $0x98] sm:$0xff] %v2561
        %2626 = vst [vmem:[%s324 + $0xa0] sm:$0xff] %v2562
        %2627 = vst [vmem:[%s324 + $0xa8] sm:$0xff] %v2563
        %2628 = vst [vmem:[%s324 + $0xb0] sm:$0xff] %v2564
        %2629 = vst [vmem:[%s324 + $0xb8] sm:$0xff] %v2565
        %2630 = vst [vmem:[%s324 + $0xc0] sm:$0xff] %v2566
        %2631 = vst [vmem:[%s324 + $0xc8] sm:$0xff] %v2567
        %2632 = vst [vmem:[%s324 + $0xd0] sm:$0xff] %v2568
        %2633 = vst [vmem:[%s324 + $0xd8] sm:$0xff] %v2569
        %2634 = vst [vmem:[%s324 + $0xe0] sm:$0xff] %v2570
        %2635 = vst [vmem:[%s324 + $0xe8] sm:$0xff] %v2571
        %2636 = vst [vmem:[%s324 + $0xf0] sm:$0xff] %v2572
        %2637 = vst [vmem:[%s324 + $0xf8] sm:$0xff] %v2573
        %s2638 = sand.u32 %s206, 1
        %s2639 = scalar_lea.sflag [#allocation4], %s2638
        %s2640 = sand.u32 %s206, 1
        %s2641 = smul.addr %s2640, 256
        %s2642 = scalar_lea.vmem [#allocation5], %s2641
        // Predicated region
        $region57: #{tpu_custom_call.1} parent=51 // pred_check
          %p2643 = pneg %p216
        $region58: #{tpu_custom_call.1} parent=51 // pred_check_branch
          %2645 = sbr.rel (%p2643) target = $region60
        $region59: #{tpu_custom_call.1} parent=51 // pred_region
          %s2646 = smul.u32 32, %s25
          %s2648 = ssub.s32 4096, 4096
          %2649 = vsyncadd %s2639, %s2648
          %s2650 = smul.addr %s2646, 2
          %s2651 = smul.addr %s2650, 64
          %s2652 = scalar_lea.hbm %s8, %s2651
          %s2653 = sshll.u32 %s2642, 4
          %s2654 = int_to_ptr.vmem [resolvable:$true] %s2653
          %2659 = dma.vmem_to_hbm [thread:$0]  %s2654, 4096, %s2652, %s2639, 128, 128, 8
        $region60: #{tpu_custom_call.1} parent=51 // pred_fallthru
          _
      $region52: #{tpu_custom_call.1} parent=5 // pred_fallthru
        _
      %p2660 = scmp.le.s32.totalorder 2, %s20
      // Predicated region
      $region61: #{tpu_custom_call.1} parent=5 // pred_check
        %p2661 = pneg %p2660
      $region62: #{tpu_custom_call.1} parent=5 // pred_check_branch
        %2663 = sbr.rel (%p2661) target = $region64
      $region63: #{tpu_custom_call.1} parent=5 // pred_region
        %s2664 = ssub.s32 %s20, 2
        // Predicated region
        $region65: #{tpu_custom_call.1} parent=63 // pred_check
          %p2665 = pneg %p222
        $region66: #{tpu_custom_call.1} parent=63 // pred_check_branch
          %2667 = sbr.rel (%p2665) target = $region68
        $region67: #{tpu_custom_call.1} parent=63 // pred_region
          %s2668 = sand.u32 %s207, 1
          %s2669 = scalar_lea.sflag [#allocation4], %s2668
          %s2670 = sand.u32 %s207, 1
          %s2671 = smul.addr %s2670, 256
          %s2672 = scalar_lea.vmem [#allocation5], %s2671
          %2673 = dma.done %s2669, 4096
        $region68: #{tpu_custom_call.1} parent=63 // pred_fallthru
          _
      $region64: #{tpu_custom_call.1} parent=5 // pred_fallthru
        _
    $region6: #{tpu_custom_call.1} parent=1 // loop_footer
      %s24 = sadd.s32 1, %s20
    $region7: #{tpu_custom_call.1} parent=1 // loop_footer_branch
      %19 = sbr.rel target = $region3
    $region8: #{tpu_custom_call.1} parent=1 // loop_exit
      _
    %2674 = vsyncpa [#allocation3], 1
    %s2675 = scalar_lea.sflag [#allocation3], 1
    %2676 = vsyncpa %s2675, 1
    %2677 = vsyncpa [#allocation4], 1
    %s2678 = scalar_lea.sflag [#allocation4], 1
    %2679 = vsyncpa %s2678, 1

</llo_original>
